<compile_context>
chip_gen: v6e
topology: v6e:2x2x1
jax: 0.10.0
libtpu: 0.0.40
codegen_flags: <defaults>
</compile_context>

<pallas_src>
import jax
import jax.numpy as jnp
from jax import lax
from jax.experimental import pallas as pl
from jax.experimental.pallas import tpu as pltpu

ALPHA = 0.25                 # nn.PReLU() default scalar init.
SAMPLES_PER_STEP = 2         # 2 samples folded into lanes -> 256-lane MXU dots.
# TODO(synk): with real trained weights, plumb the learned per-layer PReLU alpha and the real
#             residual-BN running stats into the folded parameters.


def _prelu(x):
    return jnp.where(x > 0, x, ALPHA * x)


def _round8(n):
    return ((n + 7) // 8) * 8


# ---------------------------------------------------------------------------
# Fused kernel builder. One grid step processes SAMPLES_PER_STEP samples laid out as a
# (C, S*T*V) lane-dense slab; all 4 st_gcn blocks run back-to-back on-chip.
# ---------------------------------------------------------------------------
def _make_kernel(L, V, co_pads):
    def st_gcn(x, a, m_prev, m_next, lanes, wgr_ref, wtk_ref, vec_ref, cp):
        f32 = jnp.float32
        # merged gcn + residual 1x1 convs: one (2*Co, Ci) x (Ci, lanes) dot, split sublanes
        both = jnp.dot(wgr_ref[...], x, preferred_element_type=f32)
        h, res = both[:cp], both[cp:]
        vec = vec_ref[...]                                    # (Co, 4): [bg, s1, t1, bt+br]
        bg, s1, t1, b2 = vec[:, 0:1], vec[:, 1:2], vec[:, 2:3], vec[:, 3:4]
        # adjacency mix over the block-diag (sample, t) adjacency, then folded BN1 + PReLU
        h = jnp.dot(h + bg, a, preferred_element_type=f32)
        y = _prelu(h * s1 + t1)
        # temporal taps y[t-1]/y[t+1]: XLU roll + lane-iota mask (zero pad at t=0 / t=T-1)
        ym1 = jnp.where(m_prev, pltpu.roll(y, V, axis=1), 0.0)
        yp1 = jnp.where(m_next, pltpu.roll(y, lanes - V, axis=1), 0.0)
        # fused 3-tap temporal conv (+ folded BN2) as a single MXU dot over stacked taps
        ystack = jnp.concatenate([ym1, y, yp1], axis=0)       # (3*Co, lanes)
        acc = jnp.dot(wtk_ref[...], ystack, preferred_element_type=f32)
        return _prelu(acc + b2 + res)

    def kernel(x_ref, a_ref, *rest):
        ev_ref, dv_ref = rest[-2:]
        prm = rest[:-2]                                       # 3 param refs per block
        lanes = x_ref.shape[-1]
        lane = lax.broadcasted_iota(jnp.int32, (1, lanes), 1)
        tmod = lane % L
        m_prev = tmod >= V                                    # t >= 1   (valid y[t-1])
        m_next = tmod < (L - V)                               # t <= T-2 (valid y[t+1])
        a = a_ref[...]

        h = st_gcn(x_ref[...], a, m_prev, m_next, lanes, *prm[0:3], co_pads[0])   # encoder_1
        ev = st_gcn(h, a, m_prev, m_next, lanes, *prm[3:6], co_pads[1])           # encoder_2
        h = st_gcn(ev, a, m_prev, m_next, lanes, *prm[6:9], co_pads[2])           # decoder_1
        dv = st_gcn(h, a, m_prev, m_next, lanes, *prm[9:12], co_pads[3])          # decoder_2

        ev_ref[...] = ev
        dv_ref[...] = dv

    return kernel


# ---------------------------------------------------------------------------
# Wrapper: pad/pack params, fold samples into lanes, call the fused kernel.
# ---------------------------------------------------------------------------
def graph_autoencoder(v, a, params):
    """v: (N, C_in, T, V) NCHW; a: (T, V, V). Returns (ev, dv) in NCHW."""
    f32 = jnp.float32
    N, cin, T, Vn = v.shape
    L = T * Vn
    S = SAMPLES_PER_STEP
    G = -(-N // S)                       # grid steps (pad N up to a multiple of S)
    Np = G * S
    lanes = S * L

    blocks = ("enc1", "enc2", "dec1", "dec2")
    packed, co_pads = [], []
    for name in blocks:
        p = params[name]
        co, ci = p["wg"].shape
        cp, cip = _round8(co), _round8(ci)
        co_pads.append(cp)
        pad2 = lambda w, r, c: jnp.pad(w, ((0, r - w.shape[0]), (0, c - w.shape[1])))
        wgr = jnp.concatenate([pad2(p["wg"], cp, cip), pad2(p["wr"], cp, cip)], axis=0)
        wt3 = jnp.pad(p["wt3"], ((0, 0), (0, cp - co), (0, cp - co)))
        wtk = jnp.concatenate([wt3[0], wt3[1], wt3[2]], axis=1)        # (Co, 3*Co)
        padv = lambda x: jnp.pad(x.reshape(-1), (0, cp - co))
        vec = jnp.stack([padv(p["bg"]), padv(p["s1"]), padv(p["t1"]),
                         padv(p["bt"] + p["br"])], axis=1)             # (Co, 4)
        packed += [wgr.astype(f32), wtk.astype(f32), vec.astype(f32)]
    co_pads = tuple(co_pads)
    cin_pad = _round8(cin)
    latent_pad, out_pad = co_pads[1], co_pads[3]

    # input: pad channels/batch, fold S samples into the lane dim -> (G, C, S*T*V)
    x = v.astype(f32).reshape(N, cin, L)
    x = jnp.pad(x, ((0, Np - N), (0, cin_pad - cin), (0, 0)))
    x = x.reshape(G, S, cin_pad, L).transpose(0, 2, 1, 3).reshape(G, cin_pad, lanes)

    # block-diagonal adjacency over (sample, t); shared by all 4 blocks, DMA'd once
    eye_t = jnp.eye(T, dtype=f32)
    a1 = (eye_t[:, None, :, None] * a.astype(f32)[:, :, None, :]).reshape(L, L)
    big_a = jnp.kron(jnp.eye(S, dtype=f32), a1)                        # (lanes, lanes)

    kernel = _make_kernel(L, Vn, co_pads)

    const = lambda arr: pl.BlockSpec(arr.shape, lambda g, _nd=arr.ndim: (0,) * _nd)
    in_specs = ([pl.BlockSpec((None, cin_pad, lanes), lambda g: (g, 0, 0)), const(big_a)]
                + [const(p) for p in packed])
    out_specs = [pl.BlockSpec((None, latent_pad, lanes), lambda g: (g, 0, 0)),
                 pl.BlockSpec((None, out_pad, lanes), lambda g: (g, 0, 0))]

    # advisory cost estimate so XLA schedules/overlaps this tiny custom call sensibly
    flops = 0
    ci_list = [cin_pad, co_pads[0], co_pads[1], co_pads[2]]
    for cp, cip in zip(co_pads, ci_list):
        flops += 2 * (2 * cp) * cip * lanes          # merged gcn + residual 1x1 conv
        flops += 2 * cp * lanes * lanes              # adjacency mix
        flops += 2 * cp * (3 * cp) * lanes           # fused 3-tap temporal conv
    flops *= G
    bytes_accessed = 4 * (x.size + big_a.size + sum(p.size for p in packed)
                          + G * (latent_pad + out_pad) * lanes)

    ev, dv = pl.pallas_call(
        kernel,
        out_shape=(jax.ShapeDtypeStruct((G, latent_pad, lanes), f32),
                   jax.ShapeDtypeStruct((G, out_pad, lanes), f32)),
        grid=(G,),
        in_specs=in_specs,
        out_specs=out_specs,
        compiler_params=pltpu.CompilerParams(dimension_semantics=("parallel",)),
        cost_estimate=pl.CostEstimate(flops=flops, transcendentals=0,
                                      bytes_accessed=bytes_accessed),
    )(x, big_a, *packed)

    def unfold(y, c_valid):
        c = y.shape[1]
        y = y.reshape(G, c, S, L).transpose(0, 2, 1, 3).reshape(Np, c, T, Vn)
        return y[:N, :c_valid]

    return unfold(ev, params["enc2"]["wg"].shape[0]), unfold(dv, cin)


# ---------------------------------------------------------------------------
# Deterministic synthetic parameters + eval-mode BatchNorm folding.
# ---------------------------------------------------------------------------
def init_st_gcn_params(key, ci, co, eps=1e-5):
    ks = jax.random.split(key, 16)
    rnd = lambda i, shape, s=0.2: (s * jax.random.normal(ks[i], shape)).astype(jnp.float32)

    wg = rnd(0, (co, ci))            # gcn Conv2d(ci, co, (1,1)) weight (squeezed)
    bg = rnd(1, (co,), 0.1)
    g1, b1 = 1.0 + rnd(2, (co,), 0.1), rnd(3, (co,), 0.1)          # tcn BN1
    m1, v1 = rnd(4, (co,), 0.1), 1.0 + jnp.abs(rnd(5, (co,), 0.1))
    wt = rnd(6, (co, co, 3))         # tcn Conv2d(co, co, (3,1)) weight (squeezed)
    bt = rnd(7, (co,), 0.1)
    g2, b2 = 1.0 + rnd(8, (co,), 0.1), rnd(9, (co,), 0.1)          # tcn BN2
    m2, v2 = rnd(10, (co,), 0.1), 1.0 + jnp.abs(rnd(11, (co,), 0.1))
    wr = rnd(12, (co, ci))           # residual Conv2d(ci, co, 1) weight
    brc = rnd(13, (co,), 0.1)
    gr, brn = 1.0 + rnd(14, (co,), 0.05), rnd(15, (co,), 0.05)     # residual BN
    mr, vr = jnp.zeros((co,), jnp.float32), jnp.ones((co,), jnp.float32)

    # Fold eval-mode BatchNorm into per-channel affine scale/shift.
    s1 = g1 / jnp.sqrt(v1 + eps); t1 = b1 - m1 * s1
    s2 = g2 / jnp.sqrt(v2 + eps); t2 = b2 - m2 * s2
    sr = gr / jnp.sqrt(vr + eps); tr = brn - mr * sr

    wt3 = jnp.transpose(wt * s2[:, None, None], (2, 0, 1))   # (3, Co, Co), BN2 folded
    return dict(wg=wg, bg=bg, s1=s1, t1=t1,
                wt3=wt3.astype(jnp.float32), bt=s2 * bt + t2,
                wr=(wr * sr[:, None]).astype(jnp.float32), br=sr * brc + tr)


# ---------------------------------------------------------------------------
# Pure-JAX reference (mirrors the PyTorch op order, NCHW) for validation.
# ---------------------------------------------------------------------------
def _ref_st_gcn(x, a, p):
    T = x.shape[2]
    hi = "highest"
    bb = lambda z: z.reshape(1, -1, 1, 1)
    h = jnp.einsum("oi,nitv->notv", p["wg"], x, precision=hi) + bb(p["bg"])
    h = jnp.einsum("nctv,tvw->nctw", h, a, precision=hi)
    h = h * bb(p["s1"]) + bb(p["t1"])
    h = jnp.where(h > 0, h, ALPHA * h)
    hp = jnp.pad(h, ((0, 0), (0, 0), (1, 1), (0, 0)))
    tc = sum(jnp.einsum("oi,nitv->notv", p["wt3"][k], hp[:, :, k:k + T, :], precision=hi)
             for k in range(3))
    tc = tc + bb(p["bt"])
    res = jnp.einsum("oi,nitv->notv", p["wr"], x, precision=hi) + bb(p["br"])
    z = tc + res
    return jnp.where(z > 0, z, ALPHA * z), a


def graph_autoencoder_ref(v, a, params):
    x, a = _ref_st_gcn(v, a, params["enc1"])
    ev, a = _ref_st_gcn(x, a, params["enc2"])
    x, a = _ref_st_gcn(ev, a, params["dec1"])
    dv, a = _ref_st_gcn(x, a, params["dec2"])
    return ev, dv


if __name__ == "__main__":
    N, C_IN, LATENT, T, V_NODES = 2, 2, 32, 8, 16   # T*V = 128 per sample; 256 lanes per step
    MID = LATENT // 2

    key = jax.random.PRNGKey(0)
    k_v, k_a, k1, k2, k3, k4 = jax.random.split(key, 6)
    v = jax.random.normal(k_v, (N, C_IN, T, V_NODES), dtype=jnp.float32)
    a = jax.random.normal(k_a, (T, V_NODES, V_NODES), dtype=jnp.float32)

    params = dict(
        enc1=init_st_gcn_params(k1, C_IN, MID),
        enc2=init_st_gcn_params(k2, MID, LATENT),
        dec1=init_st_gcn_params(k3, LATENT, MID),
        dec2=init_st_gcn_params(k4, MID, C_IN),
    )

    ev, dv = jax.jit(graph_autoencoder)(v, a, params)
    jax.block_until_ready((ev, dv))

    assert ev.shape == (N, LATENT, T, V_NODES)
    assert dv.shape == (N, C_IN, T, V_NODES)

    ev_ref, dv_ref = graph_autoencoder_ref(v, a, params)
    assert bool(jnp.all(jnp.isfinite(ev))) and bool(jnp.all(jnp.isfinite(dv)))
    assert jnp.allclose(ev, ev_ref, atol=2e-2, rtol=2e-2)
    assert jnp.allclose(dv, dv_ref, atol=2e-2, rtol=2e-2)

    print("KERNEL_OK")
</pallas_src>

<mosaic_0001>
module attributes {stable_mosaic.version = 11 : i64} {
  func.func @kernel(%arg0: i32, %arg1: memref<1x8x256xf32, #tpu.memory_space<vmem>>, %arg2: memref<256x256xf32, #tpu.memory_space<vmem>>, %arg3: memref<32x8xf32, #tpu.memory_space<vmem>>, %arg4: memref<16x48xf32, #tpu.memory_space<vmem>>, %arg5: memref<16x4xf32, #tpu.memory_space<vmem>>, %arg6: memref<64x16xf32, #tpu.memory_space<vmem>>, %arg7: memref<32x96xf32, #tpu.memory_space<vmem>>, %arg8: memref<32x4xf32, #tpu.memory_space<vmem>>, %arg9: memref<32x32xf32, #tpu.memory_space<vmem>>, %arg10: memref<16x48xf32, #tpu.memory_space<vmem>>, %arg11: memref<16x4xf32, #tpu.memory_space<vmem>>, %arg12: memref<16x16xf32, #tpu.memory_space<vmem>>, %arg13: memref<8x24xf32, #tpu.memory_space<vmem>>, %arg14: memref<8x4xf32, #tpu.memory_space<vmem>>, %arg15: memref<1x32x256xf32, #tpu.memory_space<vmem>>, %arg16: memref<1x8x256xf32, #tpu.memory_space<vmem>>) attributes {dimension_semantics = [#tpu.dimension_semantics<parallel>], iteration_bounds = array<i64: 1>, scalar_prefetch = 0 : i64, scratch_operands = 0 : i64, tpu.core_type = #tpu.core_type<tc>, window_params = [{transform_indices = @transform_0, window_bounds = array<i64: 1, 8, 256>}, {pipeline_mode = #tpu.pipeline_mode<synchronous>, transform_indices = @transform_1, window_bounds = array<i64: 256, 256>}, {pipeline_mode = #tpu.pipeline_mode<synchronous>, transform_indices = @transform_2, window_bounds = array<i64: 32, 8>}, {pipeline_mode = #tpu.pipeline_mode<synchronous>, transform_indices = @transform_3, window_bounds = array<i64: 16, 48>}, {pipeline_mode = #tpu.pipeline_mode<synchronous>, transform_indices = @transform_4, window_bounds = array<i64: 16, 4>}, {pipeline_mode = #tpu.pipeline_mode<synchronous>, transform_indices = @transform_5, window_bounds = array<i64: 64, 16>}, {pipeline_mode = #tpu.pipeline_mode<synchronous>, transform_indices = @transform_6, window_bounds = array<i64: 32, 96>}, {pipeline_mode = #tpu.pipeline_mode<synchronous>, transform_indices = @transform_7, window_bounds = array<i64: 32, 4>}, {pipeline_mode = #tpu.pipeline_mode<synchronous>, transform_indices = @transform_8, window_bounds = array<i64: 32, 32>}, {pipeline_mode = #tpu.pipeline_mode<synchronous>, transform_indices = @transform_9, window_bounds = array<i64: 16, 48>}, {pipeline_mode = #tpu.pipeline_mode<synchronous>, transform_indices = @transform_10, window_bounds = array<i64: 16, 4>}, {pipeline_mode = #tpu.pipeline_mode<synchronous>, transform_indices = @transform_11, window_bounds = array<i64: 16, 16>}, {pipeline_mode = #tpu.pipeline_mode<synchronous>, transform_indices = @transform_12, window_bounds = array<i64: 8, 24>}, {pipeline_mode = #tpu.pipeline_mode<synchronous>, transform_indices = @transform_13, window_bounds = array<i64: 8, 4>}, {transform_indices = @transform_14, window_bounds = array<i64: 1, 32, 256>}, {transform_indices = @transform_15, window_bounds = array<i64: 1, 8, 256>}]} {
    %0 = tpu.iota {dimensions = array<i32: 1>} : vector<1x256xi32>
    %c128_i32 = arith.constant 128 : i32
    %c0_i32 = arith.constant 0 : i32
    %1 = arith.cmpi eq, %c128_i32, %c0_i32 : i32
    %c1_i32 = arith.constant 1 : i32
    %2 = arith.select %1, %c1_i32, %c128_i32 : i32
    %3 = vector.broadcast %2 : i32 to vector<1x256xi32>
    %4 = arith.remsi %0, %3 : vector<1x256xi32>
    %c0_i32_0 = arith.constant 0 : i32
    %5 = vector.broadcast %c0_i32_0 : i32 to vector<1x256xi32>
    %6 = arith.cmpi ne, %4, %5 : vector<1x256xi32>
    %c0_i32_1 = arith.constant 0 : i32
    %7 = vector.broadcast %c0_i32_1 : i32 to vector<1x256xi32>
    %8 = arith.cmpi slt, %4, %7 : vector<1x256xi32>
    %c0_i32_2 = arith.constant 0 : i32
    %9 = arith.cmpi slt, %2, %c0_i32_2 : i32
    %10 = vector.broadcast %9 : i1 to vector<1x256xi1>
    %11 = vector.broadcast %10 : vector<1x256xi1> to vector<1x256xi1>
    %12 = arith.xori %8, %11 : vector<1x256xi1>
    %13 = arith.andi %12, %6 : vector<1x256xi1>
    %14 = vector.broadcast %2 : i32 to vector<1x256xi32>
    %15 = arith.addi %4, %14 : vector<1x256xi32>
    %16 = arith.select %13, %15, %4 : vector<1x256xi1>, vector<1x256xi32>
    %c16_i32 = arith.constant 16 : i32
    %17 = vector.broadcast %c16_i32 : i32 to vector<1x256xi32>
    %18 = arith.cmpi sge, %16, %17 : vector<1x256xi32>
    %c112_i32 = arith.constant 112 : i32
    %19 = vector.broadcast %c112_i32 : i32 to vector<1x256xi32>
    %20 = arith.cmpi slt, %16, %19 : vector<1x256xi32>
    %c0 = arith.constant 0 : index
    %c0_3 = arith.constant 0 : index
    %21 = vector.load %arg2[%c0, %c0_3] : memref<256x256xf32, #tpu.memory_space<vmem>>, vector<256x256xf32>
    %c0_4 = arith.constant 0 : index
    %c0_5 = arith.constant 0 : index
    %c0_6 = arith.constant 0 : index
    %22 = vector.load %arg1[%c0_4, %c0_5, %c0_6] : memref<1x8x256xf32, #tpu.memory_space<vmem>>, vector<1x8x256xf32>
    %23 = vector.shape_cast %22 : vector<1x8x256xf32> to vector<8x256xf32>
    %c0_7 = arith.constant 0 : index
    %c0_8 = arith.constant 0 : index
    %24 = vector.load %arg3[%c0_7, %c0_8] : memref<32x8xf32, #tpu.memory_space<vmem>>, vector<32x8xf32>
    %cst = arith.constant dense<0.000000e+00> : vector<32x256xf32>
    %25 = tpu.matmul %24, %23, %cst {dimension_numbers = #tpu.dot_dimension_numbers<[1], [0], [0], [1], [0, 0, 1, 1], [], []>} : vector<32x8xf32>, vector<8x256xf32>, vector<32x256xf32> -> vector<32x256xf32>
    %26 = vector.extract_strided_slice %25 {offsets = [0, 0], sizes = [16, 256], strides = [1, 1]} : vector<32x256xf32> to vector<16x256xf32>
    %27 = vector.extract_strided_slice %25 {offsets = [16, 0], sizes = [16, 256], strides = [1, 1]} : vector<32x256xf32> to vector<16x256xf32>
    %c0_9 = arith.constant 0 : index
    %c0_10 = arith.constant 0 : index
    %28 = vector.load %arg5[%c0_9, %c0_10] : memref<16x4xf32, #tpu.memory_space<vmem>>, vector<16x4xf32>
    %29 = vector.extract_strided_slice %28 {offsets = [0, 0], sizes = [16, 1], strides = [1, 1]} : vector<16x4xf32> to vector<16x1xf32>
    %30 = vector.extract_strided_slice %28 {offsets = [0, 1], sizes = [16, 1], strides = [1, 1]} : vector<16x4xf32> to vector<16x1xf32>
    %31 = vector.extract_strided_slice %28 {offsets = [0, 2], sizes = [16, 1], strides = [1, 1]} : vector<16x4xf32> to vector<16x1xf32>
    %32 = vector.extract_strided_slice %28 {offsets = [0, 3], sizes = [16, 1], strides = [1, 1]} : vector<16x4xf32> to vector<16x1xf32>
    %33 = vector.broadcast %29 : vector<16x1xf32> to vector<16x256xf32>
    %34 = arith.addf %26, %33 : vector<16x256xf32>
    %cst_11 = arith.constant dense<0.000000e+00> : vector<16x256xf32>
    %35 = tpu.matmul %34, %21, %cst_11 {dimension_numbers = #tpu.dot_dimension_numbers<[1], [0], [0], [1], [0, 0, 1, 1], [], []>} : vector<16x256xf32>, vector<256x256xf32>, vector<16x256xf32> -> vector<16x256xf32>
    %36 = vector.broadcast %30 : vector<16x1xf32> to vector<16x256xf32>
    %37 = arith.mulf %35, %36 : vector<16x256xf32>
    %38 = vector.broadcast %31 : vector<16x1xf32> to vector<16x256xf32>
    %39 = arith.addf %37, %38 : vector<16x256xf32>
    %cst_12 = arith.constant 0.000000e+00 : f32
    %40 = vector.broadcast %cst_12 : f32 to vector<16x256xf32>
    %41 = arith.cmpf ogt, %39, %40 : vector<16x256xf32>
    %cst_13 = arith.constant 2.500000e-01 : f32
    %42 = vector.broadcast %cst_13 : f32 to vector<16x256xf32>
    %43 = arith.mulf %42, %39 : vector<16x256xf32>
    %44 = arith.select %41, %39, %43 : vector<16x256xi1>, vector<16x256xf32>
    %c16_i32_14 = arith.constant 16 : i32
    %45 = tpu.dynamic_rotate %44 by %c16_i32_14 dim 1 : vector<16x256xf32>, i32 -> vector<16x256xf32>
    %cst_15 = arith.constant 0.000000e+00 : f32
    %46 = vector.shape_cast %18 : vector<1x256xi1> to vector<1x256xi1>
    %47 = vector.broadcast %46 : vector<1x256xi1> to vector<16x256xi1>
    %48 = vector.broadcast %cst_15 : f32 to vector<16x256xf32>
    %49 = arith.select %47, %45, %48 : vector<16x256xi1>, vector<16x256xf32>
    %c240_i32 = arith.constant 240 : i32
    %50 = tpu.dynamic_rotate %44 by %c240_i32 dim 1 : vector<16x256xf32>, i32 -> vector<16x256xf32>
    %cst_16 = arith.constant 0.000000e+00 : f32
    %51 = vector.shape_cast %20 : vector<1x256xi1> to vector<1x256xi1>
    %52 = vector.broadcast %51 : vector<1x256xi1> to vector<16x256xi1>
    %53 = vector.broadcast %cst_16 : f32 to vector<16x256xf32>
    %54 = arith.select %52, %50, %53 : vector<16x256xi1>, vector<16x256xf32>
    %55 = tpu.concatenate %49, %44, %54 in 0 : vector<16x256xf32>, vector<16x256xf32>, vector<16x256xf32> -> vector<48x256xf32>
    %c0_17 = arith.constant 0 : index
    %c0_18 = arith.constant 0 : index
    %56 = vector.load %arg4[%c0_17, %c0_18] : memref<16x48xf32, #tpu.memory_space<vmem>>, vector<16x48xf32>
    %cst_19 = arith.constant dense<0.000000e+00> : vector<16x256xf32>
    %57 = tpu.matmul %56, %55, %cst_19 {dimension_numbers = #tpu.dot_dimension_numbers<[1], [0], [0], [1], [0, 0, 1, 1], [], []>} : vector<16x48xf32>, vector<48x256xf32>, vector<16x256xf32> -> vector<16x256xf32>
    %58 = vector.broadcast %32 : vector<16x1xf32> to vector<16x256xf32>
    %59 = arith.addf %57, %58 : vector<16x256xf32>
    %60 = arith.addf %59, %27 : vector<16x256xf32>
    %cst_20 = arith.constant 0.000000e+00 : f32
    %61 = vector.broadcast %cst_20 : f32 to vector<16x256xf32>
    %62 = arith.cmpf ogt, %60, %61 : vector<16x256xf32>
    %cst_21 = arith.constant 2.500000e-01 : f32
    %63 = vector.broadcast %cst_21 : f32 to vector<16x256xf32>
    %64 = arith.mulf %63, %60 : vector<16x256xf32>
    %65 = arith.select %62, %60, %64 : vector<16x256xi1>, vector<16x256xf32>
    %c0_22 = arith.constant 0 : index
    %c0_23 = arith.constant 0 : index
    %66 = vector.load %arg6[%c0_22, %c0_23] : memref<64x16xf32, #tpu.memory_space<vmem>>, vector<64x16xf32>
    %cst_24 = arith.constant dense<0.000000e+00> : vector<64x256xf32>
    %67 = tpu.matmul %66, %65, %cst_24 {dimension_numbers = #tpu.dot_dimension_numbers<[1], [0], [0], [1], [0, 0, 1, 1], [], []>} : vector<64x16xf32>, vector<16x256xf32>, vector<64x256xf32> -> vector<64x256xf32>
    %68 = vector.extract_strided_slice %67 {offsets = [0, 0], sizes = [32, 256], strides = [1, 1]} : vector<64x256xf32> to vector<32x256xf32>
    %69 = vector.extract_strided_slice %67 {offsets = [32, 0], sizes = [32, 256], strides = [1, 1]} : vector<64x256xf32> to vector<32x256xf32>
    %c0_25 = arith.constant 0 : index
    %c0_26 = arith.constant 0 : index
    %70 = vector.load %arg8[%c0_25, %c0_26] : memref<32x4xf32, #tpu.memory_space<vmem>>, vector<32x4xf32>
    %71 = vector.extract_strided_slice %70 {offsets = [0, 0], sizes = [32, 1], strides = [1, 1]} : vector<32x4xf32> to vector<32x1xf32>
    %72 = vector.extract_strided_slice %70 {offsets = [0, 1], sizes = [32, 1], strides = [1, 1]} : vector<32x4xf32> to vector<32x1xf32>
    %73 = vector.extract_strided_slice %70 {offsets = [0, 2], sizes = [32, 1], strides = [1, 1]} : vector<32x4xf32> to vector<32x1xf32>
    %74 = vector.extract_strided_slice %70 {offsets = [0, 3], sizes = [32, 1], strides = [1, 1]} : vector<32x4xf32> to vector<32x1xf32>
    %75 = vector.broadcast %71 : vector<32x1xf32> to vector<32x256xf32>
    %76 = arith.addf %68, %75 : vector<32x256xf32>
    %cst_27 = arith.constant dense<0.000000e+00> : vector<32x256xf32>
    %77 = tpu.matmul %76, %21, %cst_27 {dimension_numbers = #tpu.dot_dimension_numbers<[1], [0], [0], [1], [0, 0, 1, 1], [], []>} : vector<32x256xf32>, vector<256x256xf32>, vector<32x256xf32> -> vector<32x256xf32>
    %78 = vector.broadcast %72 : vector<32x1xf32> to vector<32x256xf32>
    %79 = arith.mulf %77, %78 : vector<32x256xf32>
    %80 = vector.broadcast %73 : vector<32x1xf32> to vector<32x256xf32>
    %81 = arith.addf %79, %80 : vector<32x256xf32>
    %cst_28 = arith.constant 0.000000e+00 : f32
    %82 = vector.broadcast %cst_28 : f32 to vector<32x256xf32>
    %83 = arith.cmpf ogt, %81, %82 : vector<32x256xf32>
    %cst_29 = arith.constant 2.500000e-01 : f32
    %84 = vector.broadcast %cst_29 : f32 to vector<32x256xf32>
    %85 = arith.mulf %84, %81 : vector<32x256xf32>
    %86 = arith.select %83, %81, %85 : vector<32x256xi1>, vector<32x256xf32>
    %c16_i32_30 = arith.constant 16 : i32
    %87 = tpu.dynamic_rotate %86 by %c16_i32_30 dim 1 : vector<32x256xf32>, i32 -> vector<32x256xf32>
    %cst_31 = arith.constant 0.000000e+00 : f32
    %88 = vector.shape_cast %18 : vector<1x256xi1> to vector<1x256xi1>
    %89 = vector.broadcast %88 : vector<1x256xi1> to vector<32x256xi1>
    %90 = vector.broadcast %cst_31 : f32 to vector<32x256xf32>
    %91 = arith.select %89, %87, %90 : vector<32x256xi1>, vector<32x256xf32>
    %c240_i32_32 = arith.constant 240 : i32
    %92 = tpu.dynamic_rotate %86 by %c240_i32_32 dim 1 : vector<32x256xf32>, i32 -> vector<32x256xf32>
    %cst_33 = arith.constant 0.000000e+00 : f32
    %93 = vector.shape_cast %20 : vector<1x256xi1> to vector<1x256xi1>
    %94 = vector.broadcast %93 : vector<1x256xi1> to vector<32x256xi1>
    %95 = vector.broadcast %cst_33 : f32 to vector<32x256xf32>
    %96 = arith.select %94, %92, %95 : vector<32x256xi1>, vector<32x256xf32>
    %97 = tpu.concatenate %91, %86, %96 in 0 : vector<32x256xf32>, vector<32x256xf32>, vector<32x256xf32> -> vector<96x256xf32>
    %c0_34 = arith.constant 0 : index
    %c0_35 = arith.constant 0 : index
    %98 = vector.load %arg7[%c0_34, %c0_35] : memref<32x96xf32, #tpu.memory_space<vmem>>, vector<32x96xf32>
    %cst_36 = arith.constant dense<0.000000e+00> : vector<32x256xf32>
    %99 = tpu.matmul %98, %97, %cst_36 {dimension_numbers = #tpu.dot_dimension_numbers<[1], [0], [0], [1], [0, 0, 1, 1], [], []>} : vector<32x96xf32>, vector<96x256xf32>, vector<32x256xf32> -> vector<32x256xf32>
    %100 = vector.broadcast %74 : vector<32x1xf32> to vector<32x256xf32>
    %101 = arith.addf %99, %100 : vector<32x256xf32>
    %102 = arith.addf %101, %69 : vector<32x256xf32>
    %cst_37 = arith.constant 0.000000e+00 : f32
    %103 = vector.broadcast %cst_37 : f32 to vector<32x256xf32>
    %104 = arith.cmpf ogt, %102, %103 : vector<32x256xf32>
    %cst_38 = arith.constant 2.500000e-01 : f32
    %105 = vector.broadcast %cst_38 : f32 to vector<32x256xf32>
    %106 = arith.mulf %105, %102 : vector<32x256xf32>
    %107 = arith.select %104, %102, %106 : vector<32x256xi1>, vector<32x256xf32>
    %c0_39 = arith.constant 0 : index
    %c0_40 = arith.constant 0 : index
    %108 = vector.load %arg9[%c0_39, %c0_40] : memref<32x32xf32, #tpu.memory_space<vmem>>, vector<32x32xf32>
    %cst_41 = arith.constant dense<0.000000e+00> : vector<32x256xf32>
    %109 = tpu.matmul %108, %107, %cst_41 {dimension_numbers = #tpu.dot_dimension_numbers<[1], [0], [0], [1], [0, 0, 1, 1], [], []>} : vector<32x32xf32>, vector<32x256xf32>, vector<32x256xf32> -> vector<32x256xf32>
    %110 = vector.extract_strided_slice %109 {offsets = [0, 0], sizes = [16, 256], strides = [1, 1]} : vector<32x256xf32> to vector<16x256xf32>
    %111 = vector.extract_strided_slice %109 {offsets = [16, 0], sizes = [16, 256], strides = [1, 1]} : vector<32x256xf32> to vector<16x256xf32>
    %c0_42 = arith.constant 0 : index
    %c0_43 = arith.constant 0 : index
    %112 = vector.load %arg11[%c0_42, %c0_43] : memref<16x4xf32, #tpu.memory_space<vmem>>, vector<16x4xf32>
    %113 = vector.extract_strided_slice %112 {offsets = [0, 0], sizes = [16, 1], strides = [1, 1]} : vector<16x4xf32> to vector<16x1xf32>
    %114 = vector.extract_strided_slice %112 {offsets = [0, 1], sizes = [16, 1], strides = [1, 1]} : vector<16x4xf32> to vector<16x1xf32>
    %115 = vector.extract_strided_slice %112 {offsets = [0, 2], sizes = [16, 1], strides = [1, 1]} : vector<16x4xf32> to vector<16x1xf32>
    %116 = vector.extract_strided_slice %112 {offsets = [0, 3], sizes = [16, 1], strides = [1, 1]} : vector<16x4xf32> to vector<16x1xf32>
    %117 = vector.broadcast %113 : vector<16x1xf32> to vector<16x256xf32>
    %118 = arith.addf %110, %117 : vector<16x256xf32>
    %cst_44 = arith.constant dense<0.000000e+00> : vector<16x256xf32>
    %119 = tpu.matmul %118, %21, %cst_44 {dimension_numbers = #tpu.dot_dimension_numbers<[1], [0], [0], [1], [0, 0, 1, 1], [], []>} : vector<16x256xf32>, vector<256x256xf32>, vector<16x256xf32> -> vector<16x256xf32>
    %120 = vector.broadcast %114 : vector<16x1xf32> to vector<16x256xf32>
    %121 = arith.mulf %119, %120 : vector<16x256xf32>
    %122 = vector.broadcast %115 : vector<16x1xf32> to vector<16x256xf32>
    %123 = arith.addf %121, %122 : vector<16x256xf32>
    %cst_45 = arith.constant 0.000000e+00 : f32
    %124 = vector.broadcast %cst_45 : f32 to vector<16x256xf32>
    %125 = arith.cmpf ogt, %123, %124 : vector<16x256xf32>
    %cst_46 = arith.constant 2.500000e-01 : f32
    %126 = vector.broadcast %cst_46 : f32 to vector<16x256xf32>
    %127 = arith.mulf %126, %123 : vector<16x256xf32>
    %128 = arith.select %125, %123, %127 : vector<16x256xi1>, vector<16x256xf32>
    %c16_i32_47 = arith.constant 16 : i32
    %129 = tpu.dynamic_rotate %128 by %c16_i32_47 dim 1 : vector<16x256xf32>, i32 -> vector<16x256xf32>
    %cst_48 = arith.constant 0.000000e+00 : f32
    %130 = vector.shape_cast %18 : vector<1x256xi1> to vector<1x256xi1>
    %131 = vector.broadcast %130 : vector<1x256xi1> to vector<16x256xi1>
    %132 = vector.broadcast %cst_48 : f32 to vector<16x256xf32>
    %133 = arith.select %131, %129, %132 : vector<16x256xi1>, vector<16x256xf32>
    %c240_i32_49 = arith.constant 240 : i32
    %134 = tpu.dynamic_rotate %128 by %c240_i32_49 dim 1 : vector<16x256xf32>, i32 -> vector<16x256xf32>
    %cst_50 = arith.constant 0.000000e+00 : f32
    %135 = vector.shape_cast %20 : vector<1x256xi1> to vector<1x256xi1>
    %136 = vector.broadcast %135 : vector<1x256xi1> to vector<16x256xi1>
    %137 = vector.broadcast %cst_50 : f32 to vector<16x256xf32>
    %138 = arith.select %136, %134, %137 : vector<16x256xi1>, vector<16x256xf32>
    %139 = tpu.concatenate %133, %128, %138 in 0 : vector<16x256xf32>, vector<16x256xf32>, vector<16x256xf32> -> vector<48x256xf32>
    %c0_51 = arith.constant 0 : index
    %c0_52 = arith.constant 0 : index
    %140 = vector.load %arg10[%c0_51, %c0_52] : memref<16x48xf32, #tpu.memory_space<vmem>>, vector<16x48xf32>
    %cst_53 = arith.constant dense<0.000000e+00> : vector<16x256xf32>
    %141 = tpu.matmul %140, %139, %cst_53 {dimension_numbers = #tpu.dot_dimension_numbers<[1], [0], [0], [1], [0, 0, 1, 1], [], []>} : vector<16x48xf32>, vector<48x256xf32>, vector<16x256xf32> -> vector<16x256xf32>
    %142 = vector.broadcast %116 : vector<16x1xf32> to vector<16x256xf32>
    %143 = arith.addf %141, %142 : vector<16x256xf32>
    %144 = arith.addf %143, %111 : vector<16x256xf32>
    %cst_54 = arith.constant 0.000000e+00 : f32
    %145 = vector.broadcast %cst_54 : f32 to vector<16x256xf32>
    %146 = arith.cmpf ogt, %144, %145 : vector<16x256xf32>
    %cst_55 = arith.constant 2.500000e-01 : f32
    %147 = vector.broadcast %cst_55 : f32 to vector<16x256xf32>
    %148 = arith.mulf %147, %144 : vector<16x256xf32>
    %149 = arith.select %146, %144, %148 : vector<16x256xi1>, vector<16x256xf32>
    %c0_56 = arith.constant 0 : index
    %c0_57 = arith.constant 0 : index
    %150 = vector.load %arg12[%c0_56, %c0_57] : memref<16x16xf32, #tpu.memory_space<vmem>>, vector<16x16xf32>
    %cst_58 = arith.constant dense<0.000000e+00> : vector<16x256xf32>
    %151 = tpu.matmul %150, %149, %cst_58 {dimension_numbers = #tpu.dot_dimension_numbers<[1], [0], [0], [1], [0, 0, 1, 1], [], []>} : vector<16x16xf32>, vector<16x256xf32>, vector<16x256xf32> -> vector<16x256xf32>
    %152 = vector.extract_strided_slice %151 {offsets = [0, 0], sizes = [8, 256], strides = [1, 1]} : vector<16x256xf32> to vector<8x256xf32>
    %153 = vector.extract_strided_slice %151 {offsets = [8, 0], sizes = [8, 256], strides = [1, 1]} : vector<16x256xf32> to vector<8x256xf32>
    %c0_59 = arith.constant 0 : index
    %c0_60 = arith.constant 0 : index
    %154 = vector.load %arg14[%c0_59, %c0_60] : memref<8x4xf32, #tpu.memory_space<vmem>>, vector<8x4xf32>
    %155 = vector.extract_strided_slice %154 {offsets = [0, 0], sizes = [8, 1], strides = [1, 1]} : vector<8x4xf32> to vector<8x1xf32>
    %156 = vector.extract_strided_slice %154 {offsets = [0, 1], sizes = [8, 1], strides = [1, 1]} : vector<8x4xf32> to vector<8x1xf32>
    %157 = vector.extract_strided_slice %154 {offsets = [0, 2], sizes = [8, 1], strides = [1, 1]} : vector<8x4xf32> to vector<8x1xf32>
    %158 = vector.extract_strided_slice %154 {offsets = [0, 3], sizes = [8, 1], strides = [1, 1]} : vector<8x4xf32> to vector<8x1xf32>
    %159 = vector.broadcast %155 : vector<8x1xf32> to vector<8x256xf32>
    %160 = arith.addf %152, %159 : vector<8x256xf32>
    %cst_61 = arith.constant dense<0.000000e+00> : vector<8x256xf32>
    %161 = tpu.matmul %160, %21, %cst_61 {dimension_numbers = #tpu.dot_dimension_numbers<[1], [0], [0], [1], [0, 0, 1, 1], [], []>} : vector<8x256xf32>, vector<256x256xf32>, vector<8x256xf32> -> vector<8x256xf32>
    %162 = vector.broadcast %156 : vector<8x1xf32> to vector<8x256xf32>
    %163 = arith.mulf %161, %162 : vector<8x256xf32>
    %164 = vector.broadcast %157 : vector<8x1xf32> to vector<8x256xf32>
    %165 = arith.addf %163, %164 : vector<8x256xf32>
    %cst_62 = arith.constant 0.000000e+00 : f32
    %166 = vector.broadcast %cst_62 : f32 to vector<8x256xf32>
    %167 = arith.cmpf ogt, %165, %166 : vector<8x256xf32>
    %cst_63 = arith.constant 2.500000e-01 : f32
    %168 = vector.broadcast %cst_63 : f32 to vector<8x256xf32>
    %169 = arith.mulf %168, %165 : vector<8x256xf32>
    %170 = arith.select %167, %165, %169 : vector<8x256xi1>, vector<8x256xf32>
    %c16_i32_64 = arith.constant 16 : i32
    %171 = tpu.dynamic_rotate %170 by %c16_i32_64 dim 1 : vector<8x256xf32>, i32 -> vector<8x256xf32>
    %cst_65 = arith.constant 0.000000e+00 : f32
    %172 = vector.shape_cast %18 : vector<1x256xi1> to vector<1x256xi1>
    %173 = vector.broadcast %172 : vector<1x256xi1> to vector<8x256xi1>
    %174 = vector.broadcast %cst_65 : f32 to vector<8x256xf32>
    %175 = arith.select %173, %171, %174 : vector<8x256xi1>, vector<8x256xf32>
    %c240_i32_66 = arith.constant 240 : i32
    %176 = tpu.dynamic_rotate %170 by %c240_i32_66 dim 1 : vector<8x256xf32>, i32 -> vector<8x256xf32>
    %cst_67 = arith.constant 0.000000e+00 : f32
    %177 = vector.shape_cast %20 : vector<1x256xi1> to vector<1x256xi1>
    %178 = vector.broadcast %177 : vector<1x256xi1> to vector<8x256xi1>
    %179 = vector.broadcast %cst_67 : f32 to vector<8x256xf32>
    %180 = arith.select %178, %176, %179 : vector<8x256xi1>, vector<8x256xf32>
    %181 = tpu.concatenate %175, %170, %180 in 0 : vector<8x256xf32>, vector<8x256xf32>, vector<8x256xf32> -> vector<24x256xf32>
    %c0_68 = arith.constant 0 : index
    %c0_69 = arith.constant 0 : index
    %182 = vector.load %arg13[%c0_68, %c0_69] : memref<8x24xf32, #tpu.memory_space<vmem>>, vector<8x24xf32>
    %cst_70 = arith.constant dense<0.000000e+00> : vector<8x256xf32>
    %183 = tpu.matmul %182, %181, %cst_70 {dimension_numbers = #tpu.dot_dimension_numbers<[1], [0], [0], [1], [0, 0, 1, 1], [], []>} : vector<8x24xf32>, vector<24x256xf32>, vector<8x256xf32> -> vector<8x256xf32>
    %184 = vector.broadcast %158 : vector<8x1xf32> to vector<8x256xf32>
    %185 = arith.addf %183, %184 : vector<8x256xf32>
    %186 = arith.addf %185, %153 : vector<8x256xf32>
    %cst_71 = arith.constant 0.000000e+00 : f32
    %187 = vector.broadcast %cst_71 : f32 to vector<8x256xf32>
    %188 = arith.cmpf ogt, %186, %187 : vector<8x256xf32>
    %cst_72 = arith.constant 2.500000e-01 : f32
    %189 = vector.broadcast %cst_72 : f32 to vector<8x256xf32>
    %190 = arith.mulf %189, %186 : vector<8x256xf32>
    %191 = arith.select %188, %186, %190 : vector<8x256xi1>, vector<8x256xf32>
    %c0_73 = arith.constant 0 : index
    %c0_74 = arith.constant 0 : index
    %c0_75 = arith.constant 0 : index
    %192 = vector.load %arg15[%c0_73, %c0_74, %c0_75] : memref<1x32x256xf32, #tpu.memory_space<vmem>>, vector<1x32x256xf32>
    %193 = vector.shape_cast %192 : vector<1x32x256xf32> to vector<32x256xf32>
    %194 = vector.shape_cast %107 : vector<32x256xf32> to vector<1x32x256xf32>
    tpu.vector_store %arg15[%c0_73, %c0_74, %c0_75], %194 {strides = array<i32>} : memref<1x32x256xf32, #tpu.memory_space<vmem>>, vector<1x32x256xf32>,
    %c0_76 = arith.constant 0 : index
    %c0_77 = arith.constant 0 : index
    %c0_78 = arith.constant 0 : index
    %195 = vector.load %arg16[%c0_76, %c0_77, %c0_78] : memref<1x8x256xf32, #tpu.memory_space<vmem>>, vector<1x8x256xf32>
    %196 = vector.shape_cast %195 : vector<1x8x256xf32> to vector<8x256xf32>
    %197 = vector.shape_cast %191 : vector<8x256xf32> to vector<1x8x256xf32>
    tpu.vector_store %arg16[%c0_76, %c0_77, %c0_78], %197 {strides = array<i32>} : memref<1x8x256xf32, #tpu.memory_space<vmem>>, vector<1x8x256xf32>,
    return
  }
  func.func @transform_0(%arg0: i32) -> (i32, i32, i32) {
    %c0_i32 = arith.constant 0 : i32
    %c0_i32_0 = arith.constant 0 : i32
    %c0_i32_1 = arith.constant 0 : i32
    return %arg0, %c0_i32, %c0_i32_0 : i32, i32, i32
  }
  func.func @transform_1(%arg0: i32) -> (i32, i32) {
    %c0_i32 = arith.constant 0 : i32
    %c0_i32_0 = arith.constant 0 : i32
    %c0_i32_1 = arith.constant 0 : i32
    return %c0_i32, %c0_i32_0 : i32, i32
  }
  func.func @transform_2(%arg0: i32) -> (i32, i32) {
    %c0_i32 = arith.constant 0 : i32
    %c0_i32_0 = arith.constant 0 : i32
    %c0_i32_1 = arith.constant 0 : i32
    return %c0_i32, %c0_i32_0 : i32, i32
  }
  func.func @transform_3(%arg0: i32) -> (i32, i32) {
    %c0_i32 = arith.constant 0 : i32
    %c0_i32_0 = arith.constant 0 : i32
    %c0_i32_1 = arith.constant 0 : i32
    return %c0_i32, %c0_i32_0 : i32, i32
  }
  func.func @transform_4(%arg0: i32) -> (i32, i32) {
    %c0_i32 = arith.constant 0 : i32
    %c0_i32_0 = arith.constant 0 : i32
    %c0_i32_1 = arith.constant 0 : i32
    return %c0_i32, %c0_i32_0 : i32, i32
  }
  func.func @transform_5(%arg0: i32) -> (i32, i32) {
    %c0_i32 = arith.constant 0 : i32
    %c0_i32_0 = arith.constant 0 : i32
    %c0_i32_1 = arith.constant 0 : i32
    return %c0_i32, %c0_i32_0 : i32, i32
  }
  func.func @transform_6(%arg0: i32) -> (i32, i32) {
    %c0_i32 = arith.constant 0 : i32
    %c0_i32_0 = arith.constant 0 : i32
    %c0_i32_1 = arith.constant 0 : i32
    return %c0_i32, %c0_i32_0 : i32, i32
  }
  func.func @transform_7(%arg0: i32) -> (i32, i32) {
    %c0_i32 = arith.constant 0 : i32
    %c0_i32_0 = arith.constant 0 : i32
    %c0_i32_1 = arith.constant 0 : i32
    return %c0_i32, %c0_i32_0 : i32, i32
  }
  func.func @transform_8(%arg0: i32) -> (i32, i32) {
    %c0_i32 = arith.constant 0 : i32
    %c0_i32_0 = arith.constant 0 : i32
    %c0_i32_1 = arith.constant 0 : i32
    return %c0_i32, %c0_i32_0 : i32, i32
  }
  func.func @transform_9(%arg0: i32) -> (i32, i32) {
    %c0_i32 = arith.constant 0 : i32
    %c0_i32_0 = arith.constant 0 : i32
    %c0_i32_1 = arith.constant 0 : i32
    return %c0_i32, %c0_i32_0 : i32, i32
  }
  func.func @transform_10(%arg0: i32) -> (i32, i32) {
    %c0_i32 = arith.constant 0 : i32
    %c0_i32_0 = arith.constant 0 : i32
    %c0_i32_1 = arith.constant 0 : i32
    return %c0_i32, %c0_i32_0 : i32, i32
  }
  func.func @transform_11(%arg0: i32) -> (i32, i32) {
    %c0_i32 = arith.constant 0 : i32
    %c0_i32_0 = arith.constant 0 : i32
    %c0_i32_1 = arith.constant 0 : i32
    return %c0_i32, %c0_i32_0 : i32, i32
  }
  func.func @transform_12(%arg0: i32) -> (i32, i32) {
    %c0_i32 = arith.constant 0 : i32
    %c0_i32_0 = arith.constant 0 : i32
    %c0_i32_1 = arith.constant 0 : i32
    return %c0_i32, %c0_i32_0 : i32, i32
  }
  func.func @transform_13(%arg0: i32) -> (i32, i32) {
    %c0_i32 = arith.constant 0 : i32
    %c0_i32_0 = arith.constant 0 : i32
    %c0_i32_1 = arith.constant 0 : i32
    return %c0_i32, %c0_i32_0 : i32, i32
  }
  func.func @transform_14(%arg0: i32) -> (i32, i32, i32) {
    %c0_i32 = arith.constant 0 : i32
    %c0_i32_0 = arith.constant 0 : i32
    %c0_i32_1 = arith.constant 0 : i32
    return %arg0, %c0_i32, %c0_i32_0 : i32, i32, i32
  }
  func.func @transform_15(%arg0: i32) -> (i32, i32, i32) {
    %c0_i32 = arith.constant 0 : i32
    %c0_i32_0 = arith.constant 0 : i32
    %c0_i32_1 = arith.constant 0 : i32
    return %arg0, %c0_i32, %c0_i32_0 : i32, i32, i32
  }
}

</mosaic_0001>

<llo_original>
// kernel: graph_autoencoder.1
$region0: #{graph_autoencoder.1}
  #allocation0 [shape = 'u32[]', space=smem, size = 0x4, offset = 0x4, fixed_abs, tag = 'smem constant byte address 0x4 - core index']
  #allocation1 [shape = 'u32[144,128]{1,0:T(1,128)}', space=vmem, size = 0x12000, scoped, tag = 'internal scratch']
  %s0 = inlined_call_operand.vmem [shape: f32[1,8,256], index: 0, kind: input, shape index: {}]
  %s1 = inlined_call_operand.vmem [shape: f32[256,256], index: 1, kind: input, shape index: {}]
  %s2 = inlined_call_operand.vmem [shape: f32[32,8], index: 2, kind: input, shape index: {}]
  %s3 = inlined_call_operand.vmem [shape: f32[16,48], index: 3, kind: input, shape index: {}]
  %s4 = inlined_call_operand.vmem [shape: f32[16,4], index: 4, kind: input, shape index: {}]
  %s5 = inlined_call_operand.vmem [shape: f32[64,16], index: 5, kind: input, shape index: {}]
  %s6 = inlined_call_operand.vmem [shape: f32[32,96], index: 6, kind: input, shape index: {}]
  %s7 = inlined_call_operand.vmem [shape: f32[32,4], index: 7, kind: input, shape index: {}]
  %s8 = inlined_call_operand.vmem [shape: f32[32,32], index: 8, kind: input, shape index: {}]
  %s9 = inlined_call_operand.vmem [shape: f32[16,48], index: 9, kind: input, shape index: {}]
  %s10 = inlined_call_operand.vmem [shape: f32[16,4], index: 10, kind: input, shape index: {}]
  %s11 = inlined_call_operand.vmem [shape: f32[16,16], index: 11, kind: input, shape index: {}]
  %s12 = inlined_call_operand.vmem [shape: f32[8,24], index: 12, kind: input, shape index: {}]
  %s13 = inlined_call_operand.vmem [shape: f32[8,4], index: 13, kind: input, shape index: {}]
  %s14 = inlined_call_operand.vmem [shape: f32[1,32,256], index: 14, kind: output, shape index: {0}]
  %s15 = inlined_call_operand.vmem [shape: f32[1,8,256], index: 15, kind: output, shape index: {1}]
  %16 = xla_tuple %s14, %s15
  %s17 = sld [smem:[#allocation0]]
  $region74: #{graph_autoencoder.1} parent=0
    _
  %s19 = ssub.s32 1, %s17
  %s20 = scalar_select 0, %s19, %s17
  // Predicated region
  $region2: #{graph_autoencoder.1} parent=0 // pred_check
    _
  $region3: #{graph_autoencoder.1} parent=0 // pred_check_branch
    %22 = sbr.rel (0) target = $region5
  $region4: #{graph_autoencoder.1} parent=0 // pred_region
    _
  $region5: #{graph_autoencoder.1} parent=0 // pred_fallthru
    _
  // Predicated region
  $region6: #{graph_autoencoder.1} parent=0 // pred_check
    _
  $region7: #{graph_autoencoder.1} parent=0 // pred_check_branch
    %24 = sbr.rel (0) target = $region9
  $region8: #{graph_autoencoder.1} parent=0 // pred_region
    _
  $region9: #{graph_autoencoder.1} parent=0 // pred_fallthru
    _
  // Predicated region
  $region10: #{graph_autoencoder.1} parent=0 // pred_check
    _
  $region11: #{graph_autoencoder.1} parent=0 // pred_check_branch
    %26 = sbr.rel (0) target = $region13
  $region12: #{graph_autoencoder.1} parent=0 // pred_region
    _
  $region13: #{graph_autoencoder.1} parent=0 // pred_fallthru
    _
  // Predicated region
  $region14: #{graph_autoencoder.1} parent=0 // pred_check
    _
  $region15: #{graph_autoencoder.1} parent=0 // pred_check_branch
    %28 = sbr.rel (0) target = $region17
  $region16: #{graph_autoencoder.1} parent=0 // pred_region
    _
  $region17: #{graph_autoencoder.1} parent=0 // pred_fallthru
    _
  // Predicated region
  $region18: #{graph_autoencoder.1} parent=0 // pred_check
    _
  $region19: #{graph_autoencoder.1} parent=0 // pred_check_branch
    %30 = sbr.rel (0) target = $region21
  $region20: #{graph_autoencoder.1} parent=0 // pred_region
    _
  $region21: #{graph_autoencoder.1} parent=0 // pred_fallthru
    _
  // Predicated region
  $region22: #{graph_autoencoder.1} parent=0 // pred_check
    _
  $region23: #{graph_autoencoder.1} parent=0 // pred_check_branch
    %32 = sbr.rel (0) target = $region25
  $region24: #{graph_autoencoder.1} parent=0 // pred_region
    _
  $region25: #{graph_autoencoder.1} parent=0 // pred_fallthru
    _
  // Predicated region
  $region26: #{graph_autoencoder.1} parent=0 // pred_check
    _
  $region27: #{graph_autoencoder.1} parent=0 // pred_check_branch
    %34 = sbr.rel (0) target = $region29
  $region28: #{graph_autoencoder.1} parent=0 // pred_region
    _
  $region29: #{graph_autoencoder.1} parent=0 // pred_fallthru
    _
  // Predicated region
  $region30: #{graph_autoencoder.1} parent=0 // pred_check
    _
  $region31: #{graph_autoencoder.1} parent=0 // pred_check_branch
    %36 = sbr.rel (0) target = $region33
  $region32: #{graph_autoencoder.1} parent=0 // pred_region
    _
  $region33: #{graph_autoencoder.1} parent=0 // pred_fallthru
    _
  // Predicated region
  $region34: #{graph_autoencoder.1} parent=0 // pred_check
    _
  $region35: #{graph_autoencoder.1} parent=0 // pred_check_branch
    %38 = sbr.rel (0) target = $region37
  $region36: #{graph_autoencoder.1} parent=0 // pred_region
    _
  $region37: #{graph_autoencoder.1} parent=0 // pred_fallthru
    _
  // Predicated region
  $region38: #{graph_autoencoder.1} parent=0 // pred_check
    _
  $region39: #{graph_autoencoder.1} parent=0 // pred_check_branch
    %40 = sbr.rel (0) target = $region41
  $region40: #{graph_autoencoder.1} parent=0 // pred_region
    _
  $region41: #{graph_autoencoder.1} parent=0 // pred_fallthru
    _
  // Predicated region
  $region42: #{graph_autoencoder.1} parent=0 // pred_check
    _
  $region43: #{graph_autoencoder.1} parent=0 // pred_check_branch
    %42 = sbr.rel (0) target = $region45
  $region44: #{graph_autoencoder.1} parent=0 // pred_region
    _
  $region45: #{graph_autoencoder.1} parent=0 // pred_fallthru
    _
  // Predicated region
  $region46: #{graph_autoencoder.1} parent=0 // pred_check
    _
  $region47: #{graph_autoencoder.1} parent=0 // pred_check_branch
    %44 = sbr.rel (0) target = $region49
  $region48: #{graph_autoencoder.1} parent=0 // pred_region
    _
  $region49: #{graph_autoencoder.1} parent=0 // pred_fallthru
    _
  // Predicated region
  $region50: #{graph_autoencoder.1} parent=0 // pred_check
    _
  $region51: #{graph_autoencoder.1} parent=0 // pred_check_branch
    %46 = sbr.rel (0) target = $region53
  $region52: #{graph_autoencoder.1} parent=0 // pred_region
    _
  $region53: #{graph_autoencoder.1} parent=0 // pred_fallthru
    _
  // Predicated region
  $region54: #{graph_autoencoder.1} parent=0 // pred_check
    _
  $region55: #{graph_autoencoder.1} parent=0 // pred_check_branch
    %48 = sbr.rel (0) target = $region57
  $region56: #{graph_autoencoder.1} parent=0 // pred_region
    _
  $region57: #{graph_autoencoder.1} parent=0 // pred_fallthru
    _
  %v49 = vlaneseq
  %v50 = vand.u32 %v49, 127
  %v51 = vadd.s32 %v50, 128
  %vm52 = vcmp.lt.s32.totalorder %v50, 0
  %v53 = vsub.s32 0, %v50
  %v54 = vsel %vm52, %v53, %v50
  %v55 = vshrl.u32 %v54, 7
  %v56 = vand.u32 %v54, 127
  %v57 = vsub.s32 0, %v56
  %v58 = vsel %vm52, %v57, %v56
  %vm59 = vcmp.lt.s32.totalorder %v51, 0
  %v60 = vsub.s32 0, %v51
  %v61 = vsel %vm59, %v60, %v51
  %v62 = vshrl.u32 %v61, 7
  %v63 = vand.u32 %v61, 127
  %v64 = vsub.s32 0, %v63
  %v65 = vsel %vm59, %v64, %v63
  %vm66 = vcmp.ne.s32.totalorder %v58, 0
  %vm67 = vcmp.ne.s32.totalorder %v65, 0
  %vm68 = vcmp.lt.s32.totalorder %v58, 0
  %vm69 = vcmp.lt.s32.totalorder %v65, 0
  %vm70 = vmand %vm68, %vm66
  %vm71 = vmand %vm69, %vm67
  %v72 = vadd.s32 %v58, 128
  %v73 = vadd.s32 %v65, 128
  %v74 = vsel %vm70, %v72, %v58
  %v75 = vsel %vm71, %v73, %v65
  %vm76 = vcmp.ge.s32.totalorder %v74, 16
  %vm77 = vcmp.ge.s32.totalorder %v75, 16
  %vm78 = vcmp.lt.s32.totalorder %v74, 112
  %vm79 = vcmp.lt.s32.totalorder %v75, 112
  %v80 = vld [vmem:[%s1] sm:$0xff]
  %v81 = vld [vmem:[%s1 + $0x8] sm:$0xff]
  %v82 = vld [vmem:[%s1 + $0x10] sm:$0xff]
  %v83 = vld [vmem:[%s1 + $0x18] sm:$0xff]
  %v84 = vld [vmem:[%s1 + $0x20] sm:$0xff]
  %v85 = vld [vmem:[%s1 + $0x28] sm:$0xff]
  %v86 = vld [vmem:[%s1 + $0x30] sm:$0xff]
  %v87 = vld [vmem:[%s1 + $0x38] sm:$0xff]
  %v88 = vld [vmem:[%s1 + $0x40] sm:$0xff]
  %v89 = vld [vmem:[%s1 + $0x48] sm:$0xff]
  %v90 = vld [vmem:[%s1 + $0x50] sm:$0xff]
  %v91 = vld [vmem:[%s1 + $0x58] sm:$0xff]
  %v92 = vld [vmem:[%s1 + $0x60] sm:$0xff]
  %v93 = vld [vmem:[%s1 + $0x68] sm:$0xff]
  %v94 = vld [vmem:[%s1 + $0x70] sm:$0xff]
  %v95 = vld [vmem:[%s1 + $0x78] sm:$0xff]
  %v96 = vld [vmem:[%s1 + $0x80] sm:$0xff]
  %v97 = vld [vmem:[%s1 + $0x88] sm:$0xff]
  %v98 = vld [vmem:[%s1 + $0x90] sm:$0xff]
  %v99 = vld [vmem:[%s1 + $0x98] sm:$0xff]
  %v100 = vld [vmem:[%s1 + $0xa0] sm:$0xff]
  %v101 = vld [vmem:[%s1 + $0xa8] sm:$0xff]
  %v102 = vld [vmem:[%s1 + $0xb0] sm:$0xff]
  %v103 = vld [vmem:[%s1 + $0xb8] sm:$0xff]
  %v104 = vld [vmem:[%s1 + $0xc0] sm:$0xff]
  %v105 = vld [vmem:[%s1 + $0xc8] sm:$0xff]
  %v106 = vld [vmem:[%s1 + $0xd0] sm:$0xff]
  %v107 = vld [vmem:[%s1 + $0xd8] sm:$0xff]
  %v108 = vld [vmem:[%s1 + $0xe0] sm:$0xff]
  %v109 = vld [vmem:[%s1 + $0xe8] sm:$0xff]
  %v110 = vld [vmem:[%s1 + $0xf0] sm:$0xff]
  %v111 = vld [vmem:[%s1 + $0xf8] sm:$0xff]
  %v112 = vld [vmem:[%s1 + $0x100] sm:$0xff]
  %v113 = vld [vmem:[%s1 + $0x108] sm:$0xff]
  %v114 = vld [vmem:[%s1 + $0x110] sm:$0xff]
  %v115 = vld [vmem:[%s1 + $0x118] sm:$0xff]
  %v116 = vld [vmem:[%s1 + $0x120] sm:$0xff]
  %v117 = vld [vmem:[%s1 + $0x128] sm:$0xff]
  %v118 = vld [vmem:[%s1 + $0x130] sm:$0xff]
  %v119 = vld [vmem:[%s1 + $0x138] sm:$0xff]
  %v120 = vld [vmem:[%s1 + $0x140] sm:$0xff]
  %v121 = vld [vmem:[%s1 + $0x148] sm:$0xff]
  %v122 = vld [vmem:[%s1 + $0x150] sm:$0xff]
  %v123 = vld [vmem:[%s1 + $0x158] sm:$0xff]
  %v124 = vld [vmem:[%s1 + $0x160] sm:$0xff]
  %v125 = vld [vmem:[%s1 + $0x168] sm:$0xff]
  %v126 = vld [vmem:[%s1 + $0x170] sm:$0xff]
  %v127 = vld [vmem:[%s1 + $0x178] sm:$0xff]
  %v128 = vld [vmem:[%s1 + $0x180] sm:$0xff]
  %v129 = vld [vmem:[%s1 + $0x188] sm:$0xff]
  %v130 = vld [vmem:[%s1 + $0x190] sm:$0xff]
  %v131 = vld [vmem:[%s1 + $0x198] sm:$0xff]
  %v132 = vld [vmem:[%s1 + $0x1a0] sm:$0xff]
  %v133 = vld [vmem:[%s1 + $0x1a8] sm:$0xff]
  %v134 = vld [vmem:[%s1 + $0x1b0] sm:$0xff]
  %v135 = vld [vmem:[%s1 + $0x1b8] sm:$0xff]
  %v136 = vld [vmem:[%s1 + $0x1c0] sm:$0xff]
  %v137 = vld [vmem:[%s1 + $0x1c8] sm:$0xff]
  %v138 = vld [vmem:[%s1 + $0x1d0] sm:$0xff]
  %v139 = vld [vmem:[%s1 + $0x1d8] sm:$0xff]
  %v140 = vld [vmem:[%s1 + $0x1e0] sm:$0xff]
  %v141 = vld [vmem:[%s1 + $0x1e8] sm:$0xff]
  %v142 = vld [vmem:[%s1 + $0x1f0] sm:$0xff]
  %v143 = vld [vmem:[%s1 + $0x1f8] sm:$0xff]
  %v144 = vld [vmem:[%s0] sm:$0xff]
  %v145 = vld [vmem:[%s0 + $0x8] sm:$0xff]
  %v146 = vld [vmem:[%s2] sm:$0xff]
  %v147 = vld [vmem:[%s2 + $0x8] sm:$0xff]
  %v148 = vld [vmem:[%s2 + $0x10] sm:$0xff]
  %v149 = vld [vmem:[%s2 + $0x18] sm:$0xff]
  %vm150 = vcmask 64512
  %v152 = vsel %vm150, %v146, 0
  %v155 = vsel %vm150, %v147, 0
  %v158 = vsel %vm150, %v148, 0
  %v161 = vsel %vm150, %v149, 0
  %163 = vmatprep.subr.mxu0 0.0
  %164 = vmatpush1.msra.mxu0 0.0
  %165 = vmatprep.subr.mxu0 0.0
  %166 = vmatpush1.msra.mxu0 0.0
  %167 = vmatprep.subr.mxu0 0.0
  %168 = vmatpush1.msra.mxu0 0.0
  %169 = vmatprep.subr.mxu0 0.0
  %170 = vmatpush1.msra.mxu0 0.0
  %171 = vmatprep.subr.mxu0 0.0
  %172 = vmatpush1.msra.mxu0 0.0
  %173 = vmatprep.subr.mxu0 0.0
  %174 = vmatpush1.msra.mxu0 0.0
  %175 = vmatprep.subr.mxu0 0.0
  %176 = vmatpush1.msra.mxu0 0.0
  %177 = vmatprep.subr.mxu0 0.0
  %178 = vmatpush1.msra.mxu0 0.0
  %179 = vmatprep.subr.mxu0 0.0
  %180 = vmatpush1.msra.mxu0 0.0
  %181 = vmatprep.subr.mxu0 0.0
  %182 = vmatpush1.msra.mxu0 0.0
  %183 = vmatprep.subr.mxu0 0.0
  %184 = vmatpush1.msra.mxu0 0.0
  %185 = vmatprep.subr.mxu0 0.0
  %186 = vmatpush1.msra.mxu0 0.0
  %187 = vmatprep.subr.mxu0 0.0
  %188 = vmatpush1.msra.mxu0 0.0
  %189 = vmatprep.subr.mxu0 0.0
  %190 = vmatpush1.msra.mxu0 0.0
  %191 = vmatprep.subr.mxu0 0.0
  %192 = vmatpush1.msra.mxu0 0.0
  %193 = vmatprep.subr.mxu0 %v145
  %194 = vmatpush1.msra.mxu0 %v144
  %195 = vmatprep.subr.mxu0 0.0
  %196 = vmatpush2.msra.mxu0 0.0
  %197 = vmatprep.subr.mxu0 0.0
  %198 = vmatpush2.msra.mxu0 0.0
  %199 = vmatprep.subr.mxu0 0.0
  %200 = vmatpush2.msra.mxu0 0.0
  %201 = vmatprep.subr.mxu0 0.0
  %202 = vmatpush2.msra.mxu0 0.0
  %203 = vmatprep.subr.mxu0 0.0
  %204 = vmatpush2.msra.mxu0 0.0
  %205 = vmatprep.subr.mxu0 0.0
  %206 = vmatpush2.msra.mxu0 0.0
  %207 = vmatprep.subr.mxu0 0.0
  %208 = vmatpush2.msra.mxu0 0.0
  %209 = vmatprep.subr.mxu0 0.0
  %210 = vmatpush2.msra.mxu0 0.0
  %211 = vmatprep.subr.mxu0 0.0
  %212 = vmatpush2.msra.mxu0 0.0
  %213 = vmatprep.subr.mxu0 0.0
  %214 = vmatpush2.msra.mxu0 0.0
  %215 = vmatprep.subr.mxu0 0.0
  %216 = vmatpush2.msra.mxu0 0.0
  %217 = vmatprep.subr.mxu0 0.0
  %218 = vmatpush2.msra.mxu0 0.0
  %219 = vmatprep.subr.mxu0 0.0
  %220 = vmatpush2.msra.mxu0 0.0
  %221 = vmatprep.subr.mxu0 0.0
  %222 = vmatpush2.msra.mxu0 0.0
  %223 = vmatprep.subr.mxu0 0.0
  %224 = vmatpush2.msra.mxu0 0.0
  %225 = vmatprep.subr.mxu0 0.0
  %226 = vmatpush2.msra.mxu0 0.0
  %227 = vmatprep.mubr.f32.mxu0 0.0
  %228 = vmatmul.mubr.f32.gmra.mxu0 %v152
  %v229 = vpop.f32.mrf.mxu0
  %v230 = vadd.f32 0.0, %v229
  %v231 = vpop.f32.mrf.mxu0
  %v232 = vadd.f32 0.0, %v231
  %233 = vmatprep.mubr.f32.mxu0 0.0
  %234 = vmatmul.mubr.f32.gmra.mxu0 %v155
  %v235 = vpop.f32.mrf.mxu0
  %v236 = vadd.f32 0.0, %v235
  %v237 = vpop.f32.mrf.mxu0
  %v238 = vadd.f32 0.0, %v237
  %239 = vmatprep.mubr.f32.mxu0 0.0
  %240 = vmatmul.mubr.f32.gmra.mxu0 %v158
  %v241 = vpop.f32.mrf.mxu0
  %v242 = vadd.f32 0.0, %v241
  %v243 = vpop.f32.mrf.mxu0
  %v244 = vadd.f32 0.0, %v243
  %245 = vmatprep.mubr.f32.mxu0 0.0
  %246 = vmatmul.mubr.f32.gmra.mxu0 %v161
  %v247 = vpop.f32.mrf.mxu0
  %v248 = vadd.f32 0.0, %v247
  %v249 = vpop.f32.mrf.mxu0
  %v250 = vadd.f32 0.0, %v249
  %251 = vdwg.mxu0
  %v252 = vld [vmem:[%s4] sm:$0xff]
  %v253 = vld [vmem:[%s4 + $0x8] sm:$0xff]
  %255 = vset.pattern.permute.xlu0 0
  %256 = vperm.xlu0 %255, %v252
  %v257 = vpop.permute.xlu0 %256
  %260 = vset.pattern.permute.xlu0 0
  %261 = vperm.xlu0 %260, %v253
  %v262 = vpop.permute.xlu0 %261
  %v264 = vadd.f32 %v230, %v257
  %v265 = vadd.f32 %v232, %v257
  %v266 = vadd.f32 %v236, %v262
  %v267 = vadd.f32 %v238, %v262
  %268 = vmatprep.subr.mxu0 %v111
  %269 = vmatpush1.msra.mxu0 %v110
  %270 = vmatprep.subr.mxu0 %v109
  %271 = vmatpush1.msra.mxu0 %v108
  %272 = vmatprep.subr.mxu0 %v107
  %273 = vmatpush1.msra.mxu0 %v106
  %274 = vmatprep.subr.mxu0 %v105
  %275 = vmatpush1.msra.mxu0 %v104
  %276 = vmatprep.subr.mxu0 %v103
  %277 = vmatpush1.msra.mxu0 %v102
  %278 = vmatprep.subr.mxu0 %v101
  %279 = vmatpush1.msra.mxu0 %v100
  %280 = vmatprep.subr.mxu0 %v99
  %281 = vmatpush1.msra.mxu0 %v98
  %282 = vmatprep.subr.mxu0 %v97
  %283 = vmatpush1.msra.mxu0 %v96
  %284 = vmatprep.subr.mxu0 %v95
  %285 = vmatpush1.msra.mxu0 %v94
  %286 = vmatprep.subr.mxu0 %v93
  %287 = vmatpush1.msra.mxu0 %v92
  %288 = vmatprep.subr.mxu0 %v91
  %289 = vmatpush1.msra.mxu0 %v90
  %290 = vmatprep.subr.mxu0 %v89
  %291 = vmatpush1.msra.mxu0 %v88
  %292 = vmatprep.subr.mxu0 %v87
  %293 = vmatpush1.msra.mxu0 %v86
  %294 = vmatprep.subr.mxu0 %v85
  %295 = vmatpush1.msra.mxu0 %v84
  %296 = vmatprep.subr.mxu0 %v83
  %297 = vmatpush1.msra.mxu0 %v82
  %298 = vmatprep.subr.mxu0 %v81
  %299 = vmatpush1.msra.mxu0 %v80
  %300 = vmatprep.subr.mxu0 %v143
  %301 = vmatpush2.msra.mxu0 %v142
  %302 = vmatprep.subr.mxu0 %v141
  %303 = vmatpush2.msra.mxu0 %v140
  %304 = vmatprep.subr.mxu0 %v139
  %305 = vmatpush2.msra.mxu0 %v138
  %306 = vmatprep.subr.mxu0 %v137
  %307 = vmatpush2.msra.mxu0 %v136
  %308 = vmatprep.subr.mxu0 %v135
  %309 = vmatpush2.msra.mxu0 %v134
  %310 = vmatprep.subr.mxu0 %v133
  %311 = vmatpush2.msra.mxu0 %v132
  %312 = vmatprep.subr.mxu0 %v131
  %313 = vmatpush2.msra.mxu0 %v130
  %314 = vmatprep.subr.mxu0 %v129
  %315 = vmatpush2.msra.mxu0 %v128
  %316 = vmatprep.subr.mxu0 %v127
  %317 = vmatpush2.msra.mxu0 %v126
  %318 = vmatprep.subr.mxu0 %v125
  %319 = vmatpush2.msra.mxu0 %v124
  %320 = vmatprep.subr.mxu0 %v123
  %321 = vmatpush2.msra.mxu0 %v122
  %322 = vmatprep.subr.mxu0 %v121
  %323 = vmatpush2.msra.mxu0 %v120
  %324 = vmatprep.subr.mxu0 %v119
  %325 = vmatpush2.msra.mxu0 %v118
  %326 = vmatprep.subr.mxu0 %v117
  %327 = vmatpush2.msra.mxu0 %v116
  %328 = vmatprep.subr.mxu0 %v115
  %329 = vmatpush2.msra.mxu0 %v114
  %330 = vmatprep.subr.mxu0 %v113
  %331 = vmatpush2.msra.mxu0 %v112
  %332 = vmatprep.mubr.f32.mxu0 %v265
  %333 = vmatmul.mubr.f32.gmra.mxu0 %v264
  %v334 = vpop.f32.mrf.mxu0
  %v335 = vadd.f32 0.0, %v334
  %v336 = vpop.f32.mrf.mxu0
  %v337 = vadd.f32 0.0, %v336
  %338 = vmatprep.mubr.f32.mxu0 %v267
  %339 = vmatmul.mubr.f32.gmra.mxu0 %v266
  %v340 = vpop.f32.mrf.mxu0
  %v341 = vadd.f32 0.0, %v340
  %v342 = vpop.f32.mrf.mxu0
  %v343 = vadd.f32 0.0, %v342
  %344 = vdwg.mxu0
  %345 = vset.pattern.permute.xlu0 1
  %346 = vperm.xlu0 %345, %v252
  %v347 = vpop.permute.xlu0 %346
  %349 = vset.pattern.permute.xlu0 1
  %350 = vperm.xlu0 %349, %v253
  %v351 = vpop.permute.xlu0 %350
  %v353 = vmul.f32 %v335, %v347
  %v354 = vmul.f32 %v337, %v347
  %v355 = vmul.f32 %v341, %v351
  %v356 = vmul.f32 %v343, %v351
  %357 = vset.pattern.permute.xlu0 2
  %358 = vperm.xlu0 %357, %v252
  %v359 = vpop.permute.xlu0 %358
  %361 = vset.pattern.permute.xlu0 2
  %362 = vperm.xlu0 %361, %v253
  %v363 = vpop.permute.xlu0 %362
  %v365 = vadd.f32 %v353, %v359
  %v366 = vadd.f32 %v354, %v359
  %v367 = vadd.f32 %v355, %v363
  %v368 = vadd.f32 %v356, %v363
  %vm369 = vcmp.gt.f32.partialorder %v365, 0.0
  %vm370 = vcmp.gt.f32.partialorder %v366, 0.0
  %vm371 = vcmp.gt.f32.partialorder %v367, 0.0
  %vm372 = vcmp.gt.f32.partialorder %v368, 0.0
  %v373 = vmul.f32 %v365, 0.25
  %v374 = vmul.f32 %v366, 0.25
  %v375 = vmul.f32 %v367, 0.25
  %v376 = vmul.f32 %v368, 0.25
  %v377 = vsel %vm369, %v365, %v373
  %v378 = vsel %vm370, %v366, %v374
  %v379 = vsel %vm371, %v367, %v375
  %v380 = vsel %vm372, %v368, %v376
  %381 = vrot.lane.b32.xlu0 %v377, 16
  %v382 = vpop.permute.xlu0 %381
  %383 = vrot.lane.b32.xlu0 %v379, 16
  %v384 = vpop.permute.xlu0 %383
  %385 = vrot.lane.b32.xlu0 %v378, 16
  %v386 = vpop.permute.xlu0 %385
  %387 = vrot.lane.b32.xlu0 %v380, 16
  %v388 = vpop.permute.xlu0 %387
  %vm389 = vcmp.lt.s32.totalorder %v50, 16
  %v390 = vsel %vm389, %v382, %v386
  %v391 = vsel %vm389, %v384, %v388
  %v392 = vsel %vm389, %v386, %v382
  %v393 = vsel %vm389, %v388, %v384
  %v394 = vsel %vm76, 1, 0
  %v395 = vsel %vm77, 1, 0
  %vm396 = vcmp.eq.s32.totalorder %v394, 1
  %vm397 = vcmp.eq.s32.totalorder %v395, 1
  %v398 = vsel %vm396, %v392, 0.0
  %v399 = vsel %vm397, %v390, 0.0
  %v400 = vsel %vm396, %v393, 0.0
  %v401 = vsel %vm397, %v391, 0.0
  %402 = vrot.lane.b32.xlu0 %v377, 112
  %v403 = vpop.permute.xlu0 %402
  %404 = vrot.lane.b32.xlu0 %v379, 112
  %v405 = vpop.permute.xlu0 %404
  %406 = vrot.lane.b32.xlu0 %v378, 112
  %v407 = vpop.permute.xlu0 %406
  %408 = vrot.lane.b32.xlu0 %v380, 112
  %v409 = vpop.permute.xlu0 %408
  %vm410 = vcmp.lt.s32.totalorder %v50, 112
  %v411 = vsel %vm410, %v403, %v407
  %v412 = vsel %vm410, %v405, %v409
  %v413 = vsel %vm410, %v407, %v403
  %v414 = vsel %vm410, %v409, %v405
  %v415 = vsel %vm78, 1, 0
  %v416 = vsel %vm79, 1, 0
  %vm417 = vcmp.eq.s32.totalorder %v415, 1
  %vm418 = vcmp.eq.s32.totalorder %v416, 1
  %v419 = vsel %vm417, %v411, 0.0
  %v420 = vsel %vm418, %v413, 0.0
  %v421 = vsel %vm417, %v412, 0.0
  %v422 = vsel %vm418, %v414, 0.0
  %v423 = vld [vmem:[%s3] sm:$0xff]
  %v424 = vld [vmem:[%s3 + $0x8] sm:$0xff]
  %425 = vset.pattern.permute.xlu0 3
  %426 = vperm.xlu0 %425, %v252
  %v427 = vpop.permute.xlu0 %426
  %429 = vset.pattern.permute.xlu0 3
  %430 = vperm.xlu0 %429, %v253
  %v431 = vpop.permute.xlu0 %430
  %vm433 = vcmask 392192
  %v435 = vsel %vm433, %v423, 0
  %v438 = vsel %vm433, %v424, 0
  %440 = vmatprep.subr.mxu0 0.0
  %441 = vmatpush1.msra.mxu0 0.0
  %442 = vmatprep.subr.mxu0 0.0
  %443 = vmatpush1.msra.mxu0 0.0
  %444 = vmatprep.subr.mxu0 0.0
  %445 = vmatpush1.msra.mxu0 0.0
  %446 = vmatprep.subr.mxu0 0.0
  %447 = vmatpush1.msra.mxu0 0.0
  %448 = vmatprep.subr.mxu0 0.0
  %449 = vmatpush1.msra.mxu0 0.0
  %450 = vmatprep.subr.mxu0 0.0
  %451 = vmatpush1.msra.mxu0 0.0
  %452 = vmatprep.subr.mxu0 0.0
  %453 = vmatpush1.msra.mxu0 0.0
  %454 = vmatprep.subr.mxu0 0.0
  %455 = vmatpush1.msra.mxu0 0.0
  %456 = vmatprep.subr.mxu0 0.0
  %457 = vmatpush1.msra.mxu0 0.0
  %458 = vmatprep.subr.mxu0 0.0
  %459 = vmatpush1.msra.mxu0 0.0
  %460 = vmatprep.subr.mxu0 %v422
  %461 = vmatpush1.msra.mxu0 %v421
  %462 = vmatprep.subr.mxu0 %v420
  %463 = vmatpush1.msra.mxu0 %v419
  %464 = vmatprep.subr.mxu0 %v380
  %465 = vmatpush1.msra.mxu0 %v379
  %466 = vmatprep.subr.mxu0 %v378
  %467 = vmatpush1.msra.mxu0 %v377
  %468 = vmatprep.subr.mxu0 %v401
  %469 = vmatpush1.msra.mxu0 %v400
  %470 = vmatprep.subr.mxu0 %v399
  %471 = vmatpush1.msra.mxu0 %v398
  %472 = vmatprep.subr.mxu0 0.0
  %473 = vmatpush2.msra.mxu0 0.0
  %474 = vmatprep.subr.mxu0 0.0
  %475 = vmatpush2.msra.mxu0 0.0
  %476 = vmatprep.subr.mxu0 0.0
  %477 = vmatpush2.msra.mxu0 0.0
  %478 = vmatprep.subr.mxu0 0.0
  %479 = vmatpush2.msra.mxu0 0.0
  %480 = vmatprep.subr.mxu0 0.0
  %481 = vmatpush2.msra.mxu0 0.0
  %482 = vmatprep.subr.mxu0 0.0
  %483 = vmatpush2.msra.mxu0 0.0
  %484 = vmatprep.subr.mxu0 0.0
  %485 = vmatpush2.msra.mxu0 0.0
  %486 = vmatprep.subr.mxu0 0.0
  %487 = vmatpush2.msra.mxu0 0.0
  %488 = vmatprep.subr.mxu0 0.0
  %489 = vmatpush2.msra.mxu0 0.0
  %490 = vmatprep.subr.mxu0 0.0
  %491 = vmatpush2.msra.mxu0 0.0
  %492 = vmatprep.subr.mxu0 0.0
  %493 = vmatpush2.msra.mxu0 0.0
  %494 = vmatprep.subr.mxu0 0.0
  %495 = vmatpush2.msra.mxu0 0.0
  %496 = vmatprep.subr.mxu0 0.0
  %497 = vmatpush2.msra.mxu0 0.0
  %498 = vmatprep.subr.mxu0 0.0
  %499 = vmatpush2.msra.mxu0 0.0
  %500 = vmatprep.subr.mxu0 0.0
  %501 = vmatpush2.msra.mxu0 0.0
  %502 = vmatprep.subr.mxu0 0.0
  %503 = vmatpush2.msra.mxu0 0.0
  %504 = vmatprep.mubr.f32.mxu0 0.0
  %505 = vmatmul.mubr.f32.gmra.mxu0 %v435
  %v506 = vpop.f32.mrf.mxu0
  %v507 = vadd.f32 %v427, %v506
  %v508 = vpop.f32.mrf.mxu0
  %v509 = vadd.f32 %v427, %v508
  %510 = vmatprep.mubr.f32.mxu0 0.0
  %511 = vmatmul.mubr.f32.gmra.mxu0 %v438
  %v512 = vpop.f32.mrf.mxu0
  %v513 = vadd.f32 %v431, %v512
  %v514 = vpop.f32.mrf.mxu0
  %v515 = vadd.f32 %v431, %v514
  %516 = vdwg.mxu0
  %v517 = vadd.f32 %v507, %v242
  %v518 = vadd.f32 %v509, %v244
  %v519 = vadd.f32 %v513, %v248
  %v520 = vadd.f32 %v515, %v250
  %vm521 = vcmp.gt.f32.partialorder %v517, 0.0
  %vm522 = vcmp.gt.f32.partialorder %v518, 0.0
  %vm523 = vcmp.gt.f32.partialorder %v519, 0.0
  %vm524 = vcmp.gt.f32.partialorder %v520, 0.0
  %v525 = vmul.f32 %v517, 0.25
  %v526 = vmul.f32 %v518, 0.25
  %v527 = vmul.f32 %v519, 0.25
  %v528 = vmul.f32 %v520, 0.25
  %v529 = vsel %vm521, %v517, %v525
  %v530 = vsel %vm522, %v518, %v526
  %v531 = vsel %vm523, %v519, %v527
  %v532 = vsel %vm524, %v520, %v528
  %v533 = vld [vmem:[%s5] sm:$0xff]
  %v534 = vld [vmem:[%s5 + $0x8] sm:$0xff]
  %v535 = vld [vmem:[%s5 + $0x10] sm:$0xff]
  %v536 = vld [vmem:[%s5 + $0x18] sm:$0xff]
  %v537 = vld [vmem:[%s5 + $0x20] sm:$0xff]
  %v538 = vld [vmem:[%s5 + $0x28] sm:$0xff]
  %v539 = vld [vmem:[%s5 + $0x30] sm:$0xff]
  %v540 = vld [vmem:[%s5 + $0x38] sm:$0xff]
  %vm541 = vcmask 130048
  %v543 = vsel %vm541, %v533, 0
  %v546 = vsel %vm541, %v534, 0
  %v549 = vsel %vm541, %v535, 0
  %v552 = vsel %vm541, %v536, 0
  %v555 = vsel %vm541, %v537, 0
  %v558 = vsel %vm541, %v538, 0
  %v561 = vsel %vm541, %v539, 0
  %v564 = vsel %vm541, %v540, 0
  %566 = vmatprep.subr.mxu0 0.0
  %567 = vmatpush1.msra.mxu0 0.0
  %568 = vmatprep.subr.mxu0 0.0
  %569 = vmatpush1.msra.mxu0 0.0
  %570 = vmatprep.subr.mxu0 0.0
  %571 = vmatpush1.msra.mxu0 0.0
  %572 = vmatprep.subr.mxu0 0.0
  %573 = vmatpush1.msra.mxu0 0.0
  %574 = vmatprep.subr.mxu0 0.0
  %575 = vmatpush1.msra.mxu0 0.0
  %576 = vmatprep.subr.mxu0 0.0
  %577 = vmatpush1.msra.mxu0 0.0
  %578 = vmatprep.subr.mxu0 0.0
  %579 = vmatpush1.msra.mxu0 0.0
  %580 = vmatprep.subr.mxu0 0.0
  %581 = vmatpush1.msra.mxu0 0.0
  %582 = vmatprep.subr.mxu0 0.0
  %583 = vmatpush1.msra.mxu0 0.0
  %584 = vmatprep.subr.mxu0 0.0
  %585 = vmatpush1.msra.mxu0 0.0
  %586 = vmatprep.subr.mxu0 0.0
  %587 = vmatpush1.msra.mxu0 0.0
  %588 = vmatprep.subr.mxu0 0.0
  %589 = vmatpush1.msra.mxu0 0.0
  %590 = vmatprep.subr.mxu0 0.0
  %591 = vmatpush1.msra.mxu0 0.0
  %592 = vmatprep.subr.mxu0 0.0
  %593 = vmatpush1.msra.mxu0 0.0
  %594 = vmatprep.subr.mxu0 %v532
  %595 = vmatpush1.msra.mxu0 %v531
  %596 = vmatprep.subr.mxu0 %v530
  %597 = vmatpush1.msra.mxu0 %v529
  %598 = vmatprep.subr.mxu0 0.0
  %599 = vmatpush2.msra.mxu0 0.0
  %600 = vmatprep.subr.mxu0 0.0
  %601 = vmatpush2.msra.mxu0 0.0
  %602 = vmatprep.subr.mxu0 0.0
  %603 = vmatpush2.msra.mxu0 0.0
  %604 = vmatprep.subr.mxu0 0.0
  %605 = vmatpush2.msra.mxu0 0.0
  %606 = vmatprep.subr.mxu0 0.0
  %607 = vmatpush2.msra.mxu0 0.0
  %608 = vmatprep.subr.mxu0 0.0
  %609 = vmatpush2.msra.mxu0 0.0
  %610 = vmatprep.subr.mxu0 0.0
  %611 = vmatpush2.msra.mxu0 0.0
  %612 = vmatprep.subr.mxu0 0.0
  %613 = vmatpush2.msra.mxu0 0.0
  %614 = vmatprep.subr.mxu0 0.0
  %615 = vmatpush2.msra.mxu0 0.0
  %616 = vmatprep.subr.mxu0 0.0
  %617 = vmatpush2.msra.mxu0 0.0
  %618 = vmatprep.subr.mxu0 0.0
  %619 = vmatpush2.msra.mxu0 0.0
  %620 = vmatprep.subr.mxu0 0.0
  %621 = vmatpush2.msra.mxu0 0.0
  %622 = vmatprep.subr.mxu0 0.0
  %623 = vmatpush2.msra.mxu0 0.0
  %624 = vmatprep.subr.mxu0 0.0
  %625 = vmatpush2.msra.mxu0 0.0
  %626 = vmatprep.subr.mxu0 0.0
  %627 = vmatpush2.msra.mxu0 0.0
  %628 = vmatprep.subr.mxu0 0.0
  %629 = vmatpush2.msra.mxu0 0.0
  %630 = vmatprep.mubr.f32.mxu0 0.0
  %631 = vmatmul.mubr.f32.gmra.mxu0 %v543
  %v632 = vpop.f32.mrf.mxu0
  %v633 = vadd.f32 0.0, %v632
  %v634 = vpop.f32.mrf.mxu0
  %v635 = vadd.f32 0.0, %v634
  %636 = vmatprep.mubr.f32.mxu0 0.0
  %637 = vmatmul.mubr.f32.gmra.mxu0 %v546
  %v638 = vpop.f32.mrf.mxu0
  %v639 = vadd.f32 0.0, %v638
  %v640 = vpop.f32.mrf.mxu0
  %v641 = vadd.f32 0.0, %v640
  %642 = vmatprep.mubr.f32.mxu0 0.0
  %643 = vmatmul.mubr.f32.gmra.mxu0 %v549
  %v644 = vpop.f32.mrf.mxu0
  %v645 = vadd.f32 0.0, %v644
  %v646 = vpop.f32.mrf.mxu0
  %v647 = vadd.f32 0.0, %v646
  %648 = vmatprep.mubr.f32.mxu0 0.0
  %649 = vmatmul.mubr.f32.gmra.mxu0 %v552
  %v650 = vpop.f32.mrf.mxu0
  %v651 = vadd.f32 0.0, %v650
  %v652 = vpop.f32.mrf.mxu0
  %v653 = vadd.f32 0.0, %v652
  %654 = vmatprep.mubr.f32.mxu0 0.0
  %655 = vmatmul.mubr.f32.gmra.mxu0 %v555
  %v656 = vpop.f32.mrf.mxu0
  %v657 = vadd.f32 0.0, %v656
  %v658 = vpop.f32.mrf.mxu0
  %v659 = vadd.f32 0.0, %v658
  %660 = vmatprep.mubr.f32.mxu0 0.0
  %661 = vmatmul.mubr.f32.gmra.mxu0 %v558
  %v662 = vpop.f32.mrf.mxu0
  %v663 = vadd.f32 0.0, %v662
  %v664 = vpop.f32.mrf.mxu0
  %v665 = vadd.f32 0.0, %v664
  %666 = vmatprep.mubr.f32.mxu0 0.0
  %667 = vmatmul.mubr.f32.gmra.mxu0 %v561
  %v668 = vpop.f32.mrf.mxu0
  %v669 = vadd.f32 0.0, %v668
  %v670 = vpop.f32.mrf.mxu0
  %v671 = vadd.f32 0.0, %v670
  %672 = vmatprep.mubr.f32.mxu0 0.0
  %673 = vmatmul.mubr.f32.gmra.mxu0 %v564
  %v674 = vpop.f32.mrf.mxu0
  %v675 = vadd.f32 0.0, %v674
  %v676 = vpop.f32.mrf.mxu0
  %v677 = vadd.f32 0.0, %v676
  %678 = vdwg.mxu0
  %v679 = vld [vmem:[%s7] sm:$0xff]
  %v680 = vld [vmem:[%s7 + $0x8] sm:$0xff]
  %v681 = vld [vmem:[%s7 + $0x10] sm:$0xff]
  %v682 = vld [vmem:[%s7 + $0x18] sm:$0xff]
  %684 = vset.pattern.permute.xlu0 0
  %685 = vperm.xlu0 %684, %v679
  %v686 = vpop.permute.xlu0 %685
  %689 = vset.pattern.permute.xlu0 0
  %690 = vperm.xlu0 %689, %v680
  %v691 = vpop.permute.xlu0 %690
  %694 = vset.pattern.permute.xlu0 0
  %695 = vperm.xlu0 %694, %v681
  %v696 = vpop.permute.xlu0 %695
  %699 = vset.pattern.permute.xlu0 0
  %700 = vperm.xlu0 %699, %v682
  %v701 = vpop.permute.xlu0 %700
  %v703 = vadd.f32 %v633, %v686
  %v704 = vadd.f32 %v635, %v686
  %v705 = vadd.f32 %v639, %v691
  %v706 = vadd.f32 %v641, %v691
  %v707 = vadd.f32 %v645, %v696
  %v708 = vadd.f32 %v647, %v696
  %v709 = vadd.f32 %v651, %v701
  %v710 = vadd.f32 %v653, %v701
  %711 = vmatprep.subr.mxu0 %v111
  %712 = vmatpush1.msra.mxu0 %v110
  %713 = vmatprep.subr.mxu0 %v109
  %714 = vmatpush1.msra.mxu0 %v108
  %715 = vmatprep.subr.mxu0 %v107
  %716 = vmatpush1.msra.mxu0 %v106
  %717 = vmatprep.subr.mxu0 %v105
  %718 = vmatpush1.msra.mxu0 %v104
  %719 = vmatprep.subr.mxu0 %v103
  %720 = vmatpush1.msra.mxu0 %v102
  %721 = vmatprep.subr.mxu0 %v101
  %722 = vmatpush1.msra.mxu0 %v100
  %723 = vmatprep.subr.mxu0 %v99
  %724 = vmatpush1.msra.mxu0 %v98
  %725 = vmatprep.subr.mxu0 %v97
  %726 = vmatpush1.msra.mxu0 %v96
  %727 = vmatprep.subr.mxu0 %v95
  %728 = vmatpush1.msra.mxu0 %v94
  %729 = vmatprep.subr.mxu0 %v93
  %730 = vmatpush1.msra.mxu0 %v92
  %731 = vmatprep.subr.mxu0 %v91
  %732 = vmatpush1.msra.mxu0 %v90
  %733 = vmatprep.subr.mxu0 %v89
  %734 = vmatpush1.msra.mxu0 %v88
  %735 = vmatprep.subr.mxu0 %v87
  %736 = vmatpush1.msra.mxu0 %v86
  %737 = vmatprep.subr.mxu0 %v85
  %738 = vmatpush1.msra.mxu0 %v84
  %739 = vmatprep.subr.mxu0 %v83
  %740 = vmatpush1.msra.mxu0 %v82
  %741 = vmatprep.subr.mxu0 %v81
  %742 = vmatpush1.msra.mxu0 %v80
  %743 = vmatprep.subr.mxu0 %v143
  %744 = vmatpush2.msra.mxu0 %v142
  %745 = vmatprep.subr.mxu0 %v141
  %746 = vmatpush2.msra.mxu0 %v140
  %747 = vmatprep.subr.mxu0 %v139
  %748 = vmatpush2.msra.mxu0 %v138
  %749 = vmatprep.subr.mxu0 %v137
  %750 = vmatpush2.msra.mxu0 %v136
  %751 = vmatprep.subr.mxu0 %v135
  %752 = vmatpush2.msra.mxu0 %v134
  %753 = vmatprep.subr.mxu0 %v133
  %754 = vmatpush2.msra.mxu0 %v132
  %755 = vmatprep.subr.mxu0 %v131
  %756 = vmatpush2.msra.mxu0 %v130
  %757 = vmatprep.subr.mxu0 %v129
  %758 = vmatpush2.msra.mxu0 %v128
  %759 = vmatprep.subr.mxu0 %v127
  %760 = vmatpush2.msra.mxu0 %v126
  %761 = vmatprep.subr.mxu0 %v125
  %762 = vmatpush2.msra.mxu0 %v124
  %763 = vmatprep.subr.mxu0 %v123
  %764 = vmatpush2.msra.mxu0 %v122
  %765 = vmatprep.subr.mxu0 %v121
  %766 = vmatpush2.msra.mxu0 %v120
  %767 = vmatprep.subr.mxu0 %v119
  %768 = vmatpush2.msra.mxu0 %v118
  %769 = vmatprep.subr.mxu0 %v117
  %770 = vmatpush2.msra.mxu0 %v116
  %771 = vmatprep.subr.mxu0 %v115
  %772 = vmatpush2.msra.mxu0 %v114
  %773 = vmatprep.subr.mxu0 %v113
  %774 = vmatpush2.msra.mxu0 %v112
  %775 = vmatprep.mubr.f32.mxu0 %v704
  %776 = vmatmul.mubr.f32.gmra.mxu0 %v703
  %v777 = vpop.f32.mrf.mxu0
  %v778 = vadd.f32 0.0, %v777
  %v779 = vpop.f32.mrf.mxu0
  %v780 = vadd.f32 0.0, %v779
  %781 = vmatprep.mubr.f32.mxu0 %v706
  %782 = vmatmul.mubr.f32.gmra.mxu0 %v705
  %v783 = vpop.f32.mrf.mxu0
  %v784 = vadd.f32 0.0, %v783
  %v785 = vpop.f32.mrf.mxu0
  %v786 = vadd.f32 0.0, %v785
  %787 = vmatprep.mubr.f32.mxu0 %v708
  %788 = vmatmul.mubr.f32.gmra.mxu0 %v707
  %v789 = vpop.f32.mrf.mxu0
  %v790 = vadd.f32 0.0, %v789
  %v791 = vpop.f32.mrf.mxu0
  %v792 = vadd.f32 0.0, %v791
  %793 = vmatprep.mubr.f32.mxu0 %v710
  %794 = vmatmul.mubr.f32.gmra.mxu0 %v709
  %v795 = vpop.f32.mrf.mxu0
  %v796 = vadd.f32 0.0, %v795
  %v797 = vpop.f32.mrf.mxu0
  %v798 = vadd.f32 0.0, %v797
  %799 = vdwg.mxu0
  %800 = vset.pattern.permute.xlu0 1
  %801 = vperm.xlu0 %800, %v679
  %v802 = vpop.permute.xlu0 %801
  %804 = vset.pattern.permute.xlu0 1
  %805 = vperm.xlu0 %804, %v680
  %v806 = vpop.permute.xlu0 %805
  %808 = vset.pattern.permute.xlu0 1
  %809 = vperm.xlu0 %808, %v681
  %v810 = vpop.permute.xlu0 %809
  %812 = vset.pattern.permute.xlu0 1
  %813 = vperm.xlu0 %812, %v682
  %v814 = vpop.permute.xlu0 %813
  %v816 = vmul.f32 %v778, %v802
  %v817 = vmul.f32 %v780, %v802
  %v818 = vmul.f32 %v784, %v806
  %v819 = vmul.f32 %v786, %v806
  %v820 = vmul.f32 %v790, %v810
  %v821 = vmul.f32 %v792, %v810
  %v822 = vmul.f32 %v796, %v814
  %v823 = vmul.f32 %v798, %v814
  %824 = vset.pattern.permute.xlu0 2
  %825 = vperm.xlu0 %824, %v679
  %v826 = vpop.permute.xlu0 %825
  %828 = vset.pattern.permute.xlu0 2
  %829 = vperm.xlu0 %828, %v680
  %v830 = vpop.permute.xlu0 %829
  %832 = vset.pattern.permute.xlu0 2
  %833 = vperm.xlu0 %832, %v681
  %v834 = vpop.permute.xlu0 %833
  %836 = vset.pattern.permute.xlu0 2
  %837 = vperm.xlu0 %836, %v682
  %v838 = vpop.permute.xlu0 %837
  %v840 = vadd.f32 %v816, %v826
  %v841 = vadd.f32 %v817, %v826
  %v842 = vadd.f32 %v818, %v830
  %v843 = vadd.f32 %v819, %v830
  %v844 = vadd.f32 %v820, %v834
  %v845 = vadd.f32 %v821, %v834
  %v846 = vadd.f32 %v822, %v838
  %v847 = vadd.f32 %v823, %v838
  %vm848 = vcmp.gt.f32.partialorder %v840, 0.0
  %vm849 = vcmp.gt.f32.partialorder %v841, 0.0
  %vm850 = vcmp.gt.f32.partialorder %v842, 0.0
  %vm851 = vcmp.gt.f32.partialorder %v843, 0.0
  %vm852 = vcmp.gt.f32.partialorder %v844, 0.0
  %vm853 = vcmp.gt.f32.partialorder %v845, 0.0
  %vm854 = vcmp.gt.f32.partialorder %v846, 0.0
  %vm855 = vcmp.gt.f32.partialorder %v847, 0.0
  %v856 = vmul.f32 %v840, 0.25
  %v857 = vmul.f32 %v841, 0.25
  %v858 = vmul.f32 %v842, 0.25
  %v859 = vmul.f32 %v843, 0.25
  %v860 = vmul.f32 %v844, 0.25
  %v861 = vmul.f32 %v845, 0.25
  %v862 = vmul.f32 %v846, 0.25
  %v863 = vmul.f32 %v847, 0.25
  %v864 = vsel %vm848, %v840, %v856
  %v865 = vsel %vm849, %v841, %v857
  %v866 = vsel %vm850, %v842, %v858
  %v867 = vsel %vm851, %v843, %v859
  %v868 = vsel %vm852, %v844, %v860
  %v869 = vsel %vm853, %v845, %v861
  %v870 = vsel %vm854, %v846, %v862
  %v871 = vsel %vm855, %v847, %v863
  %872 = vrot.lane.b32.xlu0 %v864, 16
  %v873 = vpop.permute.xlu0 %872
  %874 = vrot.lane.b32.xlu0 %v866, 16
  %v875 = vpop.permute.xlu0 %874
  %876 = vrot.lane.b32.xlu0 %v868, 16
  %v877 = vpop.permute.xlu0 %876
  %878 = vrot.lane.b32.xlu0 %v870, 16
  %v879 = vpop.permute.xlu0 %878
  %880 = vrot.lane.b32.xlu0 %v865, 16
  %v881 = vpop.permute.xlu0 %880
  %882 = vrot.lane.b32.xlu0 %v867, 16
  %v883 = vpop.permute.xlu0 %882
  %884 = vrot.lane.b32.xlu0 %v869, 16
  %v885 = vpop.permute.xlu0 %884
  %886 = vrot.lane.b32.xlu0 %v871, 16
  %v887 = vpop.permute.xlu0 %886
  %v888 = vsel %vm389, %v873, %v881
  %v889 = vsel %vm389, %v875, %v883
  %v890 = vsel %vm389, %v877, %v885
  %v891 = vsel %vm389, %v879, %v887
  %v892 = vsel %vm389, %v881, %v873
  %v893 = vsel %vm389, %v883, %v875
  %v894 = vsel %vm389, %v885, %v877
  %v895 = vsel %vm389, %v887, %v879
  %v896 = vsel %vm396, %v892, 0.0
  %v897 = vsel %vm397, %v888, 0.0
  %v898 = vsel %vm396, %v893, 0.0
  %v899 = vsel %vm397, %v889, 0.0
  %v900 = vsel %vm396, %v894, 0.0
  %v901 = vsel %vm397, %v890, 0.0
  %v902 = vsel %vm396, %v895, 0.0
  %v903 = vsel %vm397, %v891, 0.0
  %904 = vrot.lane.b32.xlu0 %v864, 112
  %v905 = vpop.permute.xlu0 %904
  %906 = vrot.lane.b32.xlu0 %v866, 112
  %v907 = vpop.permute.xlu0 %906
  %908 = vrot.lane.b32.xlu0 %v868, 112
  %v909 = vpop.permute.xlu0 %908
  %910 = vrot.lane.b32.xlu0 %v870, 112
  %v911 = vpop.permute.xlu0 %910
  %912 = vrot.lane.b32.xlu0 %v865, 112
  %v913 = vpop.permute.xlu0 %912
  %914 = vrot.lane.b32.xlu0 %v867, 112
  %v915 = vpop.permute.xlu0 %914
  %916 = vrot.lane.b32.xlu0 %v869, 112
  %v917 = vpop.permute.xlu0 %916
  %918 = vrot.lane.b32.xlu0 %v871, 112
  %v919 = vpop.permute.xlu0 %918
  %v920 = vsel %vm410, %v905, %v913
  %v921 = vsel %vm410, %v907, %v915
  %v922 = vsel %vm410, %v909, %v917
  %v923 = vsel %vm410, %v911, %v919
  %v924 = vsel %vm410, %v913, %v905
  %v925 = vsel %vm410, %v915, %v907
  %v926 = vsel %vm410, %v917, %v909
  %v927 = vsel %vm410, %v919, %v911
  %v928 = vsel %vm417, %v920, 0.0
  %v929 = vsel %vm418, %v924, 0.0
  %v930 = vsel %vm417, %v921, 0.0
  %v931 = vsel %vm418, %v925, 0.0
  %v932 = vsel %vm417, %v922, 0.0
  %v933 = vsel %vm418, %v926, 0.0
  %v934 = vsel %vm417, %v923, 0.0
  %v935 = vsel %vm418, %v927, 0.0
  %v936 = vld [vmem:[%s6] sm:$0xff]
  %v937 = vld [vmem:[%s6 + $0x8] sm:$0xff]
  %v938 = vld [vmem:[%s6 + $0x10] sm:$0xff]
  %v939 = vld [vmem:[%s6 + $0x18] sm:$0xff]
  %940 = vset.pattern.permute.xlu0 3
  %941 = vperm.xlu0 %940, %v679
  %v942 = vpop.permute.xlu0 %941
  %944 = vset.pattern.permute.xlu0 3
  %945 = vperm.xlu0 %944, %v680
  %v946 = vpop.permute.xlu0 %945
  %948 = vset.pattern.permute.xlu0 3
  %949 = vperm.xlu0 %948, %v681
  %v950 = vpop.permute.xlu0 %949
  %952 = vset.pattern.permute.xlu0 3
  %953 = vperm.xlu0 %952, %v682
  %v954 = vpop.permute.xlu0 %953
  %vm956 = vcmask 785408
  %v958 = vsel %vm956, %v936, 0
  %v961 = vsel %vm956, %v937, 0
  %v964 = vsel %vm956, %v938, 0
  %v967 = vsel %vm956, %v939, 0
  %969 = vmatprep.subr.mxu0 0.0
  %970 = vmatpush1.msra.mxu0 0.0
  %971 = vmatprep.subr.mxu0 0.0
  %972 = vmatpush1.msra.mxu0 0.0
  %973 = vmatprep.subr.mxu0 0.0
  %974 = vmatpush1.msra.mxu0 0.0
  %975 = vmatprep.subr.mxu0 0.0
  %976 = vmatpush1.msra.mxu0 0.0
  %977 = vmatprep.subr.mxu0 %v935
  %978 = vmatpush1.msra.mxu0 %v934
  %979 = vmatprep.subr.mxu0 %v933
  %980 = vmatpush1.msra.mxu0 %v932
  %981 = vmatprep.subr.mxu0 %v931
  %982 = vmatpush1.msra.mxu0 %v930
  %983 = vmatprep.subr.mxu0 %v929
  %984 = vmatpush1.msra.mxu0 %v928
  %985 = vmatprep.subr.mxu0 %v871
  %986 = vmatpush1.msra.mxu0 %v870
  %987 = vmatprep.subr.mxu0 %v869
  %988 = vmatpush1.msra.mxu0 %v868
  %989 = vmatprep.subr.mxu0 %v867
  %990 = vmatpush1.msra.mxu0 %v866
  %991 = vmatprep.subr.mxu0 %v865
  %992 = vmatpush1.msra.mxu0 %v864
  %993 = vmatprep.subr.mxu0 %v903
  %994 = vmatpush1.msra.mxu0 %v902
  %995 = vmatprep.subr.mxu0 %v901
  %996 = vmatpush1.msra.mxu0 %v900
  %997 = vmatprep.subr.mxu0 %v899
  %998 = vmatpush1.msra.mxu0 %v898
  %999 = vmatprep.subr.mxu0 %v897
  %1000 = vmatpush1.msra.mxu0 %v896
  %1001 = vmatprep.subr.mxu0 0.0
  %1002 = vmatpush2.msra.mxu0 0.0
  %1003 = vmatprep.subr.mxu0 0.0
  %1004 = vmatpush2.msra.mxu0 0.0
  %1005 = vmatprep.subr.mxu0 0.0
  %1006 = vmatpush2.msra.mxu0 0.0
  %1007 = vmatprep.subr.mxu0 0.0
  %1008 = vmatpush2.msra.mxu0 0.0
  %1009 = vmatprep.subr.mxu0 0.0
  %1010 = vmatpush2.msra.mxu0 0.0
  %1011 = vmatprep.subr.mxu0 0.0
  %1012 = vmatpush2.msra.mxu0 0.0
  %1013 = vmatprep.subr.mxu0 0.0
  %1014 = vmatpush2.msra.mxu0 0.0
  %1015 = vmatprep.subr.mxu0 0.0
  %1016 = vmatpush2.msra.mxu0 0.0
  %1017 = vmatprep.subr.mxu0 0.0
  %1018 = vmatpush2.msra.mxu0 0.0
  %1019 = vmatprep.subr.mxu0 0.0
  %1020 = vmatpush2.msra.mxu0 0.0
  %1021 = vmatprep.subr.mxu0 0.0
  %1022 = vmatpush2.msra.mxu0 0.0
  %1023 = vmatprep.subr.mxu0 0.0
  %1024 = vmatpush2.msra.mxu0 0.0
  %1025 = vmatprep.subr.mxu0 0.0
  %1026 = vmatpush2.msra.mxu0 0.0
  %1027 = vmatprep.subr.mxu0 0.0
  %1028 = vmatpush2.msra.mxu0 0.0
  %1029 = vmatprep.subr.mxu0 0.0
  %1030 = vmatpush2.msra.mxu0 0.0
  %1031 = vmatprep.subr.mxu0 0.0
  %1032 = vmatpush2.msra.mxu0 0.0
  %1033 = vmatprep.mubr.f32.mxu0 0.0
  %1034 = vmatmul.mubr.f32.gmra.mxu0 %v958
  %v1035 = vpop.f32.mrf.mxu0
  %v1036 = vadd.f32 %v942, %v1035
  %v1037 = vpop.f32.mrf.mxu0
  %v1038 = vadd.f32 %v942, %v1037
  %1039 = vmatprep.mubr.f32.mxu0 0.0
  %1040 = vmatmul.mubr.f32.gmra.mxu0 %v961
  %v1041 = vpop.f32.mrf.mxu0
  %v1042 = vadd.f32 %v946, %v1041
  %v1043 = vpop.f32.mrf.mxu0
  %v1044 = vadd.f32 %v946, %v1043
  %1045 = vmatprep.mubr.f32.mxu0 0.0
  %1046 = vmatmul.mubr.f32.gmra.mxu0 %v964
  %v1047 = vpop.f32.mrf.mxu0
  %v1048 = vadd.f32 %v950, %v1047
  %v1049 = vpop.f32.mrf.mxu0
  %v1050 = vadd.f32 %v950, %v1049
  %1051 = vmatprep.mubr.f32.mxu0 0.0
  %1052 = vmatmul.mubr.f32.gmra.mxu0 %v967
  %v1053 = vpop.f32.mrf.mxu0
  %v1054 = vadd.f32 %v954, %v1053
  %v1055 = vpop.f32.mrf.mxu0
  %v1056 = vadd.f32 %v954, %v1055
  %1057 = vdwg.mxu0
  %v1058 = vadd.f32 %v1036, %v657
  %v1059 = vadd.f32 %v1038, %v659
  %v1060 = vadd.f32 %v1042, %v663
  %v1061 = vadd.f32 %v1044, %v665
  %v1062 = vadd.f32 %v1048, %v669
  %v1063 = vadd.f32 %v1050, %v671
  %v1064 = vadd.f32 %v1054, %v675
  %v1065 = vadd.f32 %v1056, %v677
  %vm1066 = vcmp.gt.f32.partialorder %v1058, 0.0
  %vm1067 = vcmp.gt.f32.partialorder %v1059, 0.0
  %vm1068 = vcmp.gt.f32.partialorder %v1060, 0.0
  %vm1069 = vcmp.gt.f32.partialorder %v1061, 0.0
  %vm1070 = vcmp.gt.f32.partialorder %v1062, 0.0
  %vm1071 = vcmp.gt.f32.partialorder %v1063, 0.0
  %vm1072 = vcmp.gt.f32.partialorder %v1064, 0.0
  %vm1073 = vcmp.gt.f32.partialorder %v1065, 0.0
  %v1074 = vmul.f32 %v1058, 0.25
  %v1075 = vmul.f32 %v1059, 0.25
  %v1076 = vmul.f32 %v1060, 0.25
  %v1077 = vmul.f32 %v1061, 0.25
  %v1078 = vmul.f32 %v1062, 0.25
  %v1079 = vmul.f32 %v1063, 0.25
  %v1080 = vmul.f32 %v1064, 0.25
  %v1081 = vmul.f32 %v1065, 0.25
  %v1082 = vsel %vm1066, %v1058, %v1074
  %v1083 = vsel %vm1067, %v1059, %v1075
  %v1084 = vsel %vm1068, %v1060, %v1076
  %v1085 = vsel %vm1069, %v1061, %v1077
  %v1086 = vsel %vm1070, %v1062, %v1078
  %v1087 = vsel %vm1071, %v1063, %v1079
  %v1088 = vsel %vm1072, %v1064, %v1080
  %v1089 = vsel %vm1073, %v1065, %v1081
  %v1090 = vld [vmem:[%s8] sm:$0xff]
  %v1091 = vld [vmem:[%s8 + $0x8] sm:$0xff]
  %v1092 = vld [vmem:[%s8 + $0x10] sm:$0xff]
  %v1093 = vld [vmem:[%s8 + $0x18] sm:$0xff]
  %vm1094 = vcmask 261120
  %v1096 = vsel %vm1094, %v1090, 0
  %v1099 = vsel %vm1094, %v1091, 0
  %v1102 = vsel %vm1094, %v1092, 0
  %v1105 = vsel %vm1094, %v1093, 0
  %1107 = vmatprep.subr.mxu0 0.0
  %1108 = vmatpush1.msra.mxu0 0.0
  %1109 = vmatprep.subr.mxu0 0.0
  %1110 = vmatpush1.msra.mxu0 0.0
  %1111 = vmatprep.subr.mxu0 0.0
  %1112 = vmatpush1.msra.mxu0 0.0
  %1113 = vmatprep.subr.mxu0 0.0
  %1114 = vmatpush1.msra.mxu0 0.0
  %1115 = vmatprep.subr.mxu0 0.0
  %1116 = vmatpush1.msra.mxu0 0.0
  %1117 = vmatprep.subr.mxu0 0.0
  %1118 = vmatpush1.msra.mxu0 0.0
  %1119 = vmatprep.subr.mxu0 0.0
  %1120 = vmatpush1.msra.mxu0 0.0
  %1121 = vmatprep.subr.mxu0 0.0
  %1122 = vmatpush1.msra.mxu0 0.0
  %1123 = vmatprep.subr.mxu0 0.0
  %1124 = vmatpush1.msra.mxu0 0.0
  %1125 = vmatprep.subr.mxu0 0.0
  %1126 = vmatpush1.msra.mxu0 0.0
  %1127 = vmatprep.subr.mxu0 0.0
  %1128 = vmatpush1.msra.mxu0 0.0
  %1129 = vmatprep.subr.mxu0 0.0
  %1130 = vmatpush1.msra.mxu0 0.0
  %1131 = vmatprep.subr.mxu0 %v1089
  %1132 = vmatpush1.msra.mxu0 %v1088
  %1133 = vmatprep.subr.mxu0 %v1087
  %1134 = vmatpush1.msra.mxu0 %v1086
  %1135 = vmatprep.subr.mxu0 %v1085
  %1136 = vmatpush1.msra.mxu0 %v1084
  %1137 = vmatprep.subr.mxu0 %v1083
  %1138 = vmatpush1.msra.mxu0 %v1082
  %1139 = vmatprep.subr.mxu0 0.0
  %1140 = vmatpush2.msra.mxu0 0.0
  %1141 = vmatprep.subr.mxu0 0.0
  %1142 = vmatpush2.msra.mxu0 0.0
  %1143 = vmatprep.subr.mxu0 0.0
  %1144 = vmatpush2.msra.mxu0 0.0
  %1145 = vmatprep.subr.mxu0 0.0
  %1146 = vmatpush2.msra.mxu0 0.0
  %1147 = vmatprep.subr.mxu0 0.0
  %1148 = vmatpush2.msra.mxu0 0.0
  %1149 = vmatprep.subr.mxu0 0.0
  %1150 = vmatpush2.msra.mxu0 0.0
  %1151 = vmatprep.subr.mxu0 0.0
  %1152 = vmatpush2.msra.mxu0 0.0
  %1153 = vmatprep.subr.mxu0 0.0
  %1154 = vmatpush2.msra.mxu0 0.0
  %1155 = vmatprep.subr.mxu0 0.0
  %1156 = vmatpush2.msra.mxu0 0.0
  %1157 = vmatprep.subr.mxu0 0.0
  %1158 = vmatpush2.msra.mxu0 0.0
  %1159 = vmatprep.subr.mxu0 0.0
  %1160 = vmatpush2.msra.mxu0 0.0
  %1161 = vmatprep.subr.mxu0 0.0
  %1162 = vmatpush2.msra.mxu0 0.0
  %1163 = vmatprep.subr.mxu0 0.0
  %1164 = vmatpush2.msra.mxu0 0.0
  %1165 = vmatprep.subr.mxu0 0.0
  %1166 = vmatpush2.msra.mxu0 0.0
  %1167 = vmatprep.subr.mxu0 0.0
  %1168 = vmatpush2.msra.mxu0 0.0
  %1169 = vmatprep.subr.mxu0 0.0
  %1170 = vmatpush2.msra.mxu0 0.0
  %1171 = vmatprep.mubr.f32.mxu0 0.0
  %1172 = vmatmul.mubr.f32.gmra.mxu0 %v1096
  %v1173 = vpop.f32.mrf.mxu0
  %v1174 = vadd.f32 0.0, %v1173
  %v1175 = vpop.f32.mrf.mxu0
  %v1176 = vadd.f32 0.0, %v1175
  %1177 = vmatprep.mubr.f32.mxu0 0.0
  %1178 = vmatmul.mubr.f32.gmra.mxu0 %v1099
  %v1179 = vpop.f32.mrf.mxu0
  %v1180 = vadd.f32 0.0, %v1179
  %v1181 = vpop.f32.mrf.mxu0
  %v1182 = vadd.f32 0.0, %v1181
  %1183 = vmatprep.mubr.f32.mxu0 0.0
  %1184 = vmatmul.mubr.f32.gmra.mxu0 %v1102
  %v1185 = vpop.f32.mrf.mxu0
  %v1186 = vadd.f32 0.0, %v1185
  %v1187 = vpop.f32.mrf.mxu0
  %v1188 = vadd.f32 0.0, %v1187
  %1189 = vmatprep.mubr.f32.mxu0 0.0
  %1190 = vmatmul.mubr.f32.gmra.mxu0 %v1105
  %v1191 = vpop.f32.mrf.mxu0
  %v1192 = vadd.f32 0.0, %v1191
  %v1193 = vpop.f32.mrf.mxu0
  %v1194 = vadd.f32 0.0, %v1193
  %1195 = vdwg.mxu0
  %v1196 = vld [vmem:[%s10] sm:$0xff]
  %v1197 = vld [vmem:[%s10 + $0x8] sm:$0xff]
  %1199 = vset.pattern.permute.xlu0 0
  %1200 = vperm.xlu0 %1199, %v1196
  %v1201 = vpop.permute.xlu0 %1200
  %1204 = vset.pattern.permute.xlu0 0
  %1205 = vperm.xlu0 %1204, %v1197
  %v1206 = vpop.permute.xlu0 %1205
  %v1208 = vadd.f32 %v1174, %v1201
  %v1209 = vadd.f32 %v1176, %v1201
  %v1210 = vadd.f32 %v1180, %v1206
  %v1211 = vadd.f32 %v1182, %v1206
  %1212 = vmatprep.subr.mxu0 %v111
  %1213 = vmatpush1.msra.mxu0 %v110
  %1214 = vmatprep.subr.mxu0 %v109
  %1215 = vmatpush1.msra.mxu0 %v108
  %1216 = vmatprep.subr.mxu0 %v107
  %1217 = vmatpush1.msra.mxu0 %v106
  %1218 = vmatprep.subr.mxu0 %v105
  %1219 = vmatpush1.msra.mxu0 %v104
  %1220 = vmatprep.subr.mxu0 %v103
  %1221 = vmatpush1.msra.mxu0 %v102
  %1222 = vmatprep.subr.mxu0 %v101
  %1223 = vmatpush1.msra.mxu0 %v100
  %1224 = vmatprep.subr.mxu0 %v99
  %1225 = vmatpush1.msra.mxu0 %v98
  %1226 = vmatprep.subr.mxu0 %v97
  %1227 = vmatpush1.msra.mxu0 %v96
  %1228 = vmatprep.subr.mxu0 %v95
  %1229 = vmatpush1.msra.mxu0 %v94
  %1230 = vmatprep.subr.mxu0 %v93
  %1231 = vmatpush1.msra.mxu0 %v92
  %1232 = vmatprep.subr.mxu0 %v91
  %1233 = vmatpush1.msra.mxu0 %v90
  %1234 = vmatprep.subr.mxu0 %v89
  %1235 = vmatpush1.msra.mxu0 %v88
  %1236 = vmatprep.subr.mxu0 %v87
  %1237 = vmatpush1.msra.mxu0 %v86
  %1238 = vmatprep.subr.mxu0 %v85
  %1239 = vmatpush1.msra.mxu0 %v84
  %1240 = vmatprep.subr.mxu0 %v83
  %1241 = vmatpush1.msra.mxu0 %v82
  %1242 = vmatprep.subr.mxu0 %v81
  %1243 = vmatpush1.msra.mxu0 %v80
  %1244 = vmatprep.subr.mxu0 %v143
  %1245 = vmatpush2.msra.mxu0 %v142
  %1246 = vmatprep.subr.mxu0 %v141
  %1247 = vmatpush2.msra.mxu0 %v140
  %1248 = vmatprep.subr.mxu0 %v139
  %1249 = vmatpush2.msra.mxu0 %v138
  %1250 = vmatprep.subr.mxu0 %v137
  %1251 = vmatpush2.msra.mxu0 %v136
  %1252 = vmatprep.subr.mxu0 %v135
  %1253 = vmatpush2.msra.mxu0 %v134
  %1254 = vmatprep.subr.mxu0 %v133
  %1255 = vmatpush2.msra.mxu0 %v132
  %1256 = vmatprep.subr.mxu0 %v131
  %1257 = vmatpush2.msra.mxu0 %v130
  %1258 = vmatprep.subr.mxu0 %v129
  %1259 = vmatpush2.msra.mxu0 %v128
  %1260 = vmatprep.subr.mxu0 %v127
  %1261 = vmatpush2.msra.mxu0 %v126
  %1262 = vmatprep.subr.mxu0 %v125
  %1263 = vmatpush2.msra.mxu0 %v124
  %1264 = vmatprep.subr.mxu0 %v123
  %1265 = vmatpush2.msra.mxu0 %v122
  %1266 = vmatprep.subr.mxu0 %v121
  %1267 = vmatpush2.msra.mxu0 %v120
  %1268 = vmatprep.subr.mxu0 %v119
  %1269 = vmatpush2.msra.mxu0 %v118
  %1270 = vmatprep.subr.mxu0 %v117
  %1271 = vmatpush2.msra.mxu0 %v116
  %1272 = vmatprep.subr.mxu0 %v115
  %1273 = vmatpush2.msra.mxu0 %v114
  %1274 = vmatprep.subr.mxu0 %v113
  %1275 = vmatpush2.msra.mxu0 %v112
  %1276 = vmatprep.mubr.f32.mxu0 %v1209
  %1277 = vmatmul.mubr.f32.gmra.mxu0 %v1208
  %v1278 = vpop.f32.mrf.mxu0
  %v1279 = vadd.f32 0.0, %v1278
  %v1280 = vpop.f32.mrf.mxu0
  %v1281 = vadd.f32 0.0, %v1280
  %1282 = vmatprep.mubr.f32.mxu0 %v1211
  %1283 = vmatmul.mubr.f32.gmra.mxu0 %v1210
  %v1284 = vpop.f32.mrf.mxu0
  %v1285 = vadd.f32 0.0, %v1284
  %v1286 = vpop.f32.mrf.mxu0
  %v1287 = vadd.f32 0.0, %v1286
  %1288 = vdwg.mxu0
  %1289 = vset.pattern.permute.xlu0 1
  %1290 = vperm.xlu0 %1289, %v1196
  %v1291 = vpop.permute.xlu0 %1290
  %1293 = vset.pattern.permute.xlu0 1
  %1294 = vperm.xlu0 %1293, %v1197
  %v1295 = vpop.permute.xlu0 %1294
  %v1297 = vmul.f32 %v1279, %v1291
  %v1298 = vmul.f32 %v1281, %v1291
  %v1299 = vmul.f32 %v1285, %v1295
  %v1300 = vmul.f32 %v1287, %v1295
  %1301 = vset.pattern.permute.xlu0 2
  %1302 = vperm.xlu0 %1301, %v1196
  %v1303 = vpop.permute.xlu0 %1302
  %1305 = vset.pattern.permute.xlu0 2
  %1306 = vperm.xlu0 %1305, %v1197
  %v1307 = vpop.permute.xlu0 %1306
  %v1309 = vadd.f32 %v1297, %v1303
  %v1310 = vadd.f32 %v1298, %v1303
  %v1311 = vadd.f32 %v1299, %v1307
  %v1312 = vadd.f32 %v1300, %v1307
  %vm1313 = vcmp.gt.f32.partialorder %v1309, 0.0
  %vm1314 = vcmp.gt.f32.partialorder %v1310, 0.0
  %vm1315 = vcmp.gt.f32.partialorder %v1311, 0.0
  %vm1316 = vcmp.gt.f32.partialorder %v1312, 0.0
  %v1317 = vmul.f32 %v1309, 0.25
  %v1318 = vmul.f32 %v1310, 0.25
  %v1319 = vmul.f32 %v1311, 0.25
  %v1320 = vmul.f32 %v1312, 0.25
  %v1321 = vsel %vm1313, %v1309, %v1317
  %v1322 = vsel %vm1314, %v1310, %v1318
  %v1323 = vsel %vm1315, %v1311, %v1319
  %v1324 = vsel %vm1316, %v1312, %v1320
  %1325 = vrot.lane.b32.xlu0 %v1321, 16
  %v1326 = vpop.permute.xlu0 %1325
  %1327 = vrot.lane.b32.xlu0 %v1323, 16
  %v1328 = vpop.permute.xlu0 %1327
  %1329 = vrot.lane.b32.xlu0 %v1322, 16
  %v1330 = vpop.permute.xlu0 %1329
  %1331 = vrot.lane.b32.xlu0 %v1324, 16
  %v1332 = vpop.permute.xlu0 %1331
  %v1333 = vsel %vm389, %v1326, %v1330
  %v1334 = vsel %vm389, %v1328, %v1332
  %v1335 = vsel %vm389, %v1330, %v1326
  %v1336 = vsel %vm389, %v1332, %v1328
  %v1337 = vsel %vm396, %v1335, 0.0
  %v1338 = vsel %vm397, %v1333, 0.0
  %v1339 = vsel %vm396, %v1336, 0.0
  %v1340 = vsel %vm397, %v1334, 0.0
  %1341 = vrot.lane.b32.xlu0 %v1321, 112
  %v1342 = vpop.permute.xlu0 %1341
  %1343 = vrot.lane.b32.xlu0 %v1323, 112
  %v1344 = vpop.permute.xlu0 %1343
  %1345 = vrot.lane.b32.xlu0 %v1322, 112
  %v1346 = vpop.permute.xlu0 %1345
  %1347 = vrot.lane.b32.xlu0 %v1324, 112
  %v1348 = vpop.permute.xlu0 %1347
  %v1349 = vsel %vm410, %v1342, %v1346
  %v1350 = vsel %vm410, %v1344, %v1348
  %v1351 = vsel %vm410, %v1346, %v1342
  %v1352 = vsel %vm410, %v1348, %v1344
  %v1353 = vsel %vm417, %v1349, 0.0
  %v1354 = vsel %vm418, %v1351, 0.0
  %v1355 = vsel %vm417, %v1350, 0.0
  %v1356 = vsel %vm418, %v1352, 0.0
  %v1357 = vld [vmem:[%s9] sm:$0xff]
  %v1358 = vld [vmem:[%s9 + $0x8] sm:$0xff]
  %1359 = vset.pattern.permute.xlu0 3
  %1360 = vperm.xlu0 %1359, %v1196
  %v1361 = vpop.permute.xlu0 %1360
  %1363 = vset.pattern.permute.xlu0 3
  %1364 = vperm.xlu0 %1363, %v1197
  %v1365 = vpop.permute.xlu0 %1364
  %v1368 = vsel %vm433, %v1357, 0
  %v1371 = vsel %vm433, %v1358, 0
  %1373 = vmatprep.subr.mxu0 0.0
  %1374 = vmatpush1.msra.mxu0 0.0
  %1375 = vmatprep.subr.mxu0 0.0
  %1376 = vmatpush1.msra.mxu0 0.0
  %1377 = vmatprep.subr.mxu0 0.0
  %1378 = vmatpush1.msra.mxu0 0.0
  %1379 = vmatprep.subr.mxu0 0.0
  %1380 = vmatpush1.msra.mxu0 0.0
  %1381 = vmatprep.subr.mxu0 0.0
  %1382 = vmatpush1.msra.mxu0 0.0
  %1383 = vmatprep.subr.mxu0 0.0
  %1384 = vmatpush1.msra.mxu0 0.0
  %1385 = vmatprep.subr.mxu0 0.0
  %1386 = vmatpush1.msra.mxu0 0.0
  %1387 = vmatprep.subr.mxu0 0.0
  %1388 = vmatpush1.msra.mxu0 0.0
  %1389 = vmatprep.subr.mxu0 0.0
  %1390 = vmatpush1.msra.mxu0 0.0
  %1391 = vmatprep.subr.mxu0 0.0
  %1392 = vmatpush1.msra.mxu0 0.0
  %1393 = vmatprep.subr.mxu0 %v1356
  %1394 = vmatpush1.msra.mxu0 %v1355
  %1395 = vmatprep.subr.mxu0 %v1354
  %1396 = vmatpush1.msra.mxu0 %v1353
  %1397 = vmatprep.subr.mxu0 %v1324
  %1398 = vmatpush1.msra.mxu0 %v1323
  %1399 = vmatprep.subr.mxu0 %v1322
  %1400 = vmatpush1.msra.mxu0 %v1321
  %1401 = vmatprep.subr.mxu0 %v1340
  %1402 = vmatpush1.msra.mxu0 %v1339
  %1403 = vmatprep.subr.mxu0 %v1338
  %1404 = vmatpush1.msra.mxu0 %v1337
  %1405 = vmatprep.subr.mxu0 0.0
  %1406 = vmatpush2.msra.mxu0 0.0
  %1407 = vmatprep.subr.mxu0 0.0
  %1408 = vmatpush2.msra.mxu0 0.0
  %1409 = vmatprep.subr.mxu0 0.0
  %1410 = vmatpush2.msra.mxu0 0.0
  %1411 = vmatprep.subr.mxu0 0.0
  %1412 = vmatpush2.msra.mxu0 0.0
  %1413 = vmatprep.subr.mxu0 0.0
  %1414 = vmatpush2.msra.mxu0 0.0
  %1415 = vmatprep.subr.mxu0 0.0
  %1416 = vmatpush2.msra.mxu0 0.0
  %1417 = vmatprep.subr.mxu0 0.0
  %1418 = vmatpush2.msra.mxu0 0.0
  %1419 = vmatprep.subr.mxu0 0.0
  %1420 = vmatpush2.msra.mxu0 0.0
  %1421 = vmatprep.subr.mxu0 0.0
  %1422 = vmatpush2.msra.mxu0 0.0
  %1423 = vmatprep.subr.mxu0 0.0
  %1424 = vmatpush2.msra.mxu0 0.0
  %1425 = vmatprep.subr.mxu0 0.0
  %1426 = vmatpush2.msra.mxu0 0.0
  %1427 = vmatprep.subr.mxu0 0.0
  %1428 = vmatpush2.msra.mxu0 0.0
  %1429 = vmatprep.subr.mxu0 0.0
  %1430 = vmatpush2.msra.mxu0 0.0
  %1431 = vmatprep.subr.mxu0 0.0
  %1432 = vmatpush2.msra.mxu0 0.0
  %1433 = vmatprep.subr.mxu0 0.0
  %1434 = vmatpush2.msra.mxu0 0.0
  %1435 = vmatprep.subr.mxu0 0.0
  %1436 = vmatpush2.msra.mxu0 0.0
  %1437 = vmatprep.mubr.f32.mxu0 0.0
  %1438 = vmatmul.mubr.f32.gmra.mxu0 %v1368
  %v1439 = vpop.f32.mrf.mxu0
  %v1440 = vadd.f32 %v1361, %v1439
  %v1441 = vpop.f32.mrf.mxu0
  %v1442 = vadd.f32 %v1361, %v1441
  %1443 = vmatprep.mubr.f32.mxu0 0.0
  %1444 = vmatmul.mubr.f32.gmra.mxu0 %v1371
  %v1445 = vpop.f32.mrf.mxu0
  %v1446 = vadd.f32 %v1365, %v1445
  %v1447 = vpop.f32.mrf.mxu0
  %v1448 = vadd.f32 %v1365, %v1447
  %1449 = vdwg.mxu0
  %v1450 = vadd.f32 %v1440, %v1186
  %v1451 = vadd.f32 %v1442, %v1188
  %v1452 = vadd.f32 %v1446, %v1192
  %v1453 = vadd.f32 %v1448, %v1194
  %vm1454 = vcmp.gt.f32.partialorder %v1450, 0.0
  %vm1455 = vcmp.gt.f32.partialorder %v1451, 0.0
  %vm1456 = vcmp.gt.f32.partialorder %v1452, 0.0
  %vm1457 = vcmp.gt.f32.partialorder %v1453, 0.0
  %v1458 = vmul.f32 %v1450, 0.25
  %v1459 = vmul.f32 %v1451, 0.25
  %v1460 = vmul.f32 %v1452, 0.25
  %v1461 = vmul.f32 %v1453, 0.25
  %v1462 = vsel %vm1454, %v1450, %v1458
  %v1463 = vsel %vm1455, %v1451, %v1459
  %v1464 = vsel %vm1456, %v1452, %v1460
  %v1465 = vsel %vm1457, %v1453, %v1461
  %v1466 = vld [vmem:[%s11] sm:$0xff]
  %v1467 = vld [vmem:[%s11 + $0x8] sm:$0xff]
  %v1469 = vsel %vm541, %v1466, 0
  %v1472 = vsel %vm541, %v1467, 0
  %1474 = vmatprep.subr.mxu0 0.0
  %1475 = vmatpush1.msra.mxu0 0.0
  %1476 = vmatprep.subr.mxu0 0.0
  %1477 = vmatpush1.msra.mxu0 0.0
  %1478 = vmatprep.subr.mxu0 0.0
  %1479 = vmatpush1.msra.mxu0 0.0
  %1480 = vmatprep.subr.mxu0 0.0
  %1481 = vmatpush1.msra.mxu0 0.0
  %1482 = vmatprep.subr.mxu0 0.0
  %1483 = vmatpush1.msra.mxu0 0.0
  %1484 = vmatprep.subr.mxu0 0.0
  %1485 = vmatpush1.msra.mxu0 0.0
  %1486 = vmatprep.subr.mxu0 0.0
  %1487 = vmatpush1.msra.mxu0 0.0
  %1488 = vmatprep.subr.mxu0 0.0
  %1489 = vmatpush1.msra.mxu0 0.0
  %1490 = vmatprep.subr.mxu0 0.0
  %1491 = vmatpush1.msra.mxu0 0.0
  %1492 = vmatprep.subr.mxu0 0.0
  %1493 = vmatpush1.msra.mxu0 0.0
  %1494 = vmatprep.subr.mxu0 0.0
  %1495 = vmatpush1.msra.mxu0 0.0
  %1496 = vmatprep.subr.mxu0 0.0
  %1497 = vmatpush1.msra.mxu0 0.0
  %1498 = vmatprep.subr.mxu0 0.0
  %1499 = vmatpush1.msra.mxu0 0.0
  %1500 = vmatprep.subr.mxu0 0.0
  %1501 = vmatpush1.msra.mxu0 0.0
  %1502 = vmatprep.subr.mxu0 %v1465
  %1503 = vmatpush1.msra.mxu0 %v1464
  %1504 = vmatprep.subr.mxu0 %v1463
  %1505 = vmatpush1.msra.mxu0 %v1462
  %1506 = vmatprep.subr.mxu0 0.0
  %1507 = vmatpush2.msra.mxu0 0.0
  %1508 = vmatprep.subr.mxu0 0.0
  %1509 = vmatpush2.msra.mxu0 0.0
  %1510 = vmatprep.subr.mxu0 0.0
  %1511 = vmatpush2.msra.mxu0 0.0
  %1512 = vmatprep.subr.mxu0 0.0
  %1513 = vmatpush2.msra.mxu0 0.0
  %1514 = vmatprep.subr.mxu0 0.0
  %1515 = vmatpush2.msra.mxu0 0.0
  %1516 = vmatprep.subr.mxu0 0.0
  %1517 = vmatpush2.msra.mxu0 0.0
  %1518 = vmatprep.subr.mxu0 0.0
  %1519 = vmatpush2.msra.mxu0 0.0
  %1520 = vmatprep.subr.mxu0 0.0
  %1521 = vmatpush2.msra.mxu0 0.0
  %1522 = vmatprep.subr.mxu0 0.0
  %1523 = vmatpush2.msra.mxu0 0.0
  %1524 = vmatprep.subr.mxu0 0.0
  %1525 = vmatpush2.msra.mxu0 0.0
  %1526 = vmatprep.subr.mxu0 0.0
  %1527 = vmatpush2.msra.mxu0 0.0
  %1528 = vmatprep.subr.mxu0 0.0
  %1529 = vmatpush2.msra.mxu0 0.0
  %1530 = vmatprep.subr.mxu0 0.0
  %1531 = vmatpush2.msra.mxu0 0.0
  %1532 = vmatprep.subr.mxu0 0.0
  %1533 = vmatpush2.msra.mxu0 0.0
  %1534 = vmatprep.subr.mxu0 0.0
  %1535 = vmatpush2.msra.mxu0 0.0
  %1536 = vmatprep.subr.mxu0 0.0
  %1537 = vmatpush2.msra.mxu0 0.0
  %1538 = vmatprep.mubr.f32.mxu0 0.0
  %1539 = vmatmul.mubr.f32.gmra.mxu0 %v1469
  %v1540 = vpop.f32.mrf.mxu0
  %v1541 = vadd.f32 0.0, %v1540
  %v1542 = vpop.f32.mrf.mxu0
  %v1543 = vadd.f32 0.0, %v1542
  %1544 = vmatprep.mubr.f32.mxu0 0.0
  %1545 = vmatmul.mubr.f32.gmra.mxu0 %v1472
  %v1546 = vpop.f32.mrf.mxu0
  %v1547 = vadd.f32 0.0, %v1546
  %v1548 = vpop.f32.mrf.mxu0
  %v1549 = vadd.f32 0.0, %v1548
  %1550 = vdwg.mxu0
  %v1551 = vld [vmem:[%s13] sm:$0xff]
  %1553 = vset.pattern.permute.xlu0 0
  %1554 = vperm.xlu0 %1553, %v1551
  %v1555 = vpop.permute.xlu0 %1554
  %v1557 = vadd.f32 %v1541, %v1555
  %v1558 = vadd.f32 %v1543, %v1555
  %1559 = vmatprep.subr.mxu0 %v111
  %1560 = vmatpush1.msra.mxu0 %v110
  %1561 = vmatprep.subr.mxu0 %v109
  %1562 = vmatpush1.msra.mxu0 %v108
  %1563 = vmatprep.subr.mxu0 %v107
  %1564 = vmatpush1.msra.mxu0 %v106
  %1565 = vmatprep.subr.mxu0 %v105
  %1566 = vmatpush1.msra.mxu0 %v104
  %1567 = vmatprep.subr.mxu0 %v103
  %1568 = vmatpush1.msra.mxu0 %v102
  %1569 = vmatprep.subr.mxu0 %v101
  %1570 = vmatpush1.msra.mxu0 %v100
  %1571 = vmatprep.subr.mxu0 %v99
  %1572 = vmatpush1.msra.mxu0 %v98
  %1573 = vmatprep.subr.mxu0 %v97
  %1574 = vmatpush1.msra.mxu0 %v96
  %1575 = vmatprep.subr.mxu0 %v95
  %1576 = vmatpush1.msra.mxu0 %v94
  %1577 = vmatprep.subr.mxu0 %v93
  %1578 = vmatpush1.msra.mxu0 %v92
  %1579 = vmatprep.subr.mxu0 %v91
  %1580 = vmatpush1.msra.mxu0 %v90
  %1581 = vmatprep.subr.mxu0 %v89
  %1582 = vmatpush1.msra.mxu0 %v88
  %1583 = vmatprep.subr.mxu0 %v87
  %1584 = vmatpush1.msra.mxu0 %v86
  %1585 = vmatprep.subr.mxu0 %v85
  %1586 = vmatpush1.msra.mxu0 %v84
  %1587 = vmatprep.subr.mxu0 %v83
  %1588 = vmatpush1.msra.mxu0 %v82
  %1589 = vmatprep.subr.mxu0 %v81
  %1590 = vmatpush1.msra.mxu0 %v80
  %1591 = vmatprep.subr.mxu0 %v143
  %1592 = vmatpush2.msra.mxu0 %v142
  %1593 = vmatprep.subr.mxu0 %v141
  %1594 = vmatpush2.msra.mxu0 %v140
  %1595 = vmatprep.subr.mxu0 %v139
  %1596 = vmatpush2.msra.mxu0 %v138
  %1597 = vmatprep.subr.mxu0 %v137
  %1598 = vmatpush2.msra.mxu0 %v136
  %1599 = vmatprep.subr.mxu0 %v135
  %1600 = vmatpush2.msra.mxu0 %v134
  %1601 = vmatprep.subr.mxu0 %v133
  %1602 = vmatpush2.msra.mxu0 %v132
  %1603 = vmatprep.subr.mxu0 %v131
  %1604 = vmatpush2.msra.mxu0 %v130
  %1605 = vmatprep.subr.mxu0 %v129
  %1606 = vmatpush2.msra.mxu0 %v128
  %1607 = vmatprep.subr.mxu0 %v127
  %1608 = vmatpush2.msra.mxu0 %v126
  %1609 = vmatprep.subr.mxu0 %v125
  %1610 = vmatpush2.msra.mxu0 %v124
  %1611 = vmatprep.subr.mxu0 %v123
  %1612 = vmatpush2.msra.mxu0 %v122
  %1613 = vmatprep.subr.mxu0 %v121
  %1614 = vmatpush2.msra.mxu0 %v120
  %1615 = vmatprep.subr.mxu0 %v119
  %1616 = vmatpush2.msra.mxu0 %v118
  %1617 = vmatprep.subr.mxu0 %v117
  %1618 = vmatpush2.msra.mxu0 %v116
  %1619 = vmatprep.subr.mxu0 %v115
  %1620 = vmatpush2.msra.mxu0 %v114
  %1621 = vmatprep.subr.mxu0 %v113
  %1622 = vmatpush2.msra.mxu0 %v112
  %1623 = vmatprep.mubr.f32.mxu0 %v1558
  %1624 = vmatmul.mubr.f32.gmra.mxu0 %v1557
  %v1625 = vpop.f32.mrf.mxu0
  %v1626 = vadd.f32 0.0, %v1625
  %v1627 = vpop.f32.mrf.mxu0
  %v1628 = vadd.f32 0.0, %v1627
  %1629 = vdwg.mxu0
  %1630 = vset.pattern.permute.xlu0 1
  %1631 = vperm.xlu0 %1630, %v1551
  %v1632 = vpop.permute.xlu0 %1631
  %v1634 = vmul.f32 %v1626, %v1632
  %v1635 = vmul.f32 %v1628, %v1632
  %1636 = vset.pattern.permute.xlu0 2
  %1637 = vperm.xlu0 %1636, %v1551
  %v1638 = vpop.permute.xlu0 %1637
  %v1640 = vadd.f32 %v1634, %v1638
  %v1641 = vadd.f32 %v1635, %v1638
  %vm1642 = vcmp.gt.f32.partialorder %v1640, 0.0
  %vm1643 = vcmp.gt.f32.partialorder %v1641, 0.0
  %v1644 = vmul.f32 %v1640, 0.25
  %v1645 = vmul.f32 %v1641, 0.25
  %v1646 = vsel %vm1642, %v1640, %v1644
  %v1647 = vsel %vm1643, %v1641, %v1645
  %1648 = vrot.lane.b32.xlu0 %v1646, 16
  %v1649 = vpop.permute.xlu0 %1648
  %1650 = vrot.lane.b32.xlu0 %v1647, 16
  %v1651 = vpop.permute.xlu0 %1650
  %v1652 = vsel %vm389, %v1649, %v1651
  %v1653 = vsel %vm389, %v1651, %v1649
  %v1654 = vsel %vm396, %v1653, 0.0
  %v1655 = vsel %vm397, %v1652, 0.0
  %1656 = vrot.lane.b32.xlu0 %v1646, 112
  %v1657 = vpop.permute.xlu0 %1656
  %1658 = vrot.lane.b32.xlu0 %v1647, 112
  %v1659 = vpop.permute.xlu0 %1658
  %v1660 = vsel %vm410, %v1657, %v1659
  %v1661 = vsel %vm410, %v1659, %v1657
  %v1662 = vsel %vm417, %v1660, 0.0
  %v1663 = vsel %vm418, %v1661, 0.0
  %v1664 = vld [vmem:[%s12] sm:$0xff]
  %1665 = vset.pattern.permute.xlu0 3
  %1666 = vperm.xlu0 %1665, %v1551
  %v1667 = vpop.permute.xlu0 %1666
  %vm1669 = vcmask 195584
  %v1671 = vsel %vm1669, %v1664, 0
  %1673 = vmatprep.subr.mxu0 0.0
  %1674 = vmatpush1.msra.mxu0 0.0
  %1675 = vmatprep.subr.mxu0 0.0
  %1676 = vmatpush1.msra.mxu0 0.0
  %1677 = vmatprep.subr.mxu0 0.0
  %1678 = vmatpush1.msra.mxu0 0.0
  %1679 = vmatprep.subr.mxu0 0.0
  %1680 = vmatpush1.msra.mxu0 0.0
  %1681 = vmatprep.subr.mxu0 0.0
  %1682 = vmatpush1.msra.mxu0 0.0
  %1683 = vmatprep.subr.mxu0 0.0
  %1684 = vmatpush1.msra.mxu0 0.0
  %1685 = vmatprep.subr.mxu0 0.0
  %1686 = vmatpush1.msra.mxu0 0.0
  %1687 = vmatprep.subr.mxu0 0.0
  %1688 = vmatpush1.msra.mxu0 0.0
  %1689 = vmatprep.subr.mxu0 0.0
  %1690 = vmatpush1.msra.mxu0 0.0
  %1691 = vmatprep.subr.mxu0 0.0
  %1692 = vmatpush1.msra.mxu0 0.0
  %1693 = vmatprep.subr.mxu0 0.0
  %1694 = vmatpush1.msra.mxu0 0.0
  %1695 = vmatprep.subr.mxu0 0.0
  %1696 = vmatpush1.msra.mxu0 0.0
  %1697 = vmatprep.subr.mxu0 0.0
  %1698 = vmatpush1.msra.mxu0 0.0
  %1699 = vmatprep.subr.mxu0 %v1663
  %1700 = vmatpush1.msra.mxu0 %v1662
  %1701 = vmatprep.subr.mxu0 %v1647
  %1702 = vmatpush1.msra.mxu0 %v1646
  %1703 = vmatprep.subr.mxu0 %v1655
  %1704 = vmatpush1.msra.mxu0 %v1654
  %1705 = vmatprep.subr.mxu0 0.0
  %1706 = vmatpush2.msra.mxu0 0.0
  %1707 = vmatprep.subr.mxu0 0.0
  %1708 = vmatpush2.msra.mxu0 0.0
  %1709 = vmatprep.subr.mxu0 0.0
  %1710 = vmatpush2.msra.mxu0 0.0
  %1711 = vmatprep.subr.mxu0 0.0
  %1712 = vmatpush2.msra.mxu0 0.0
  %1713 = vmatprep.subr.mxu0 0.0
  %1714 = vmatpush2.msra.mxu0 0.0
  %1715 = vmatprep.subr.mxu0 0.0
  %1716 = vmatpush2.msra.mxu0 0.0
  %1717 = vmatprep.subr.mxu0 0.0
  %1718 = vmatpush2.msra.mxu0 0.0
  %1719 = vmatprep.subr.mxu0 0.0
  %1720 = vmatpush2.msra.mxu0 0.0
  %1721 = vmatprep.subr.mxu0 0.0
  %1722 = vmatpush2.msra.mxu0 0.0
  %1723 = vmatprep.subr.mxu0 0.0
  %1724 = vmatpush2.msra.mxu0 0.0
  %1725 = vmatprep.subr.mxu0 0.0
  %1726 = vmatpush2.msra.mxu0 0.0
  %1727 = vmatprep.subr.mxu0 0.0
  %1728 = vmatpush2.msra.mxu0 0.0
  %1729 = vmatprep.subr.mxu0 0.0
  %1730 = vmatpush2.msra.mxu0 0.0
  %1731 = vmatprep.subr.mxu0 0.0
  %1732 = vmatpush2.msra.mxu0 0.0
  %1733 = vmatprep.subr.mxu0 0.0
  %1734 = vmatpush2.msra.mxu0 0.0
  %1735 = vmatprep.subr.mxu0 0.0
  %1736 = vmatpush2.msra.mxu0 0.0
  %1737 = vmatprep.mubr.f32.mxu0 0.0
  %1738 = vmatmul.mubr.f32.gmra.mxu0 %v1671
  %v1739 = vpop.f32.mrf.mxu0
  %v1740 = vadd.f32 %v1667, %v1739
  %v1741 = vpop.f32.mrf.mxu0
  %v1742 = vadd.f32 %v1667, %v1741
  %1743 = vdwg.mxu0
  %v1744 = vadd.f32 %v1740, %v1547
  %v1745 = vadd.f32 %v1742, %v1549
  %vm1746 = vcmp.gt.f32.partialorder %v1744, 0.0
  %vm1747 = vcmp.gt.f32.partialorder %v1745, 0.0
  %v1748 = vmul.f32 %v1744, 0.25
  %v1749 = vmul.f32 %v1745, 0.25
  %v1750 = vsel %vm1746, %v1744, %v1748
  %v1751 = vsel %vm1747, %v1745, %v1749
  %1752 = vst [vmem:[%s14] sm:$0xff] %v1082
  %1753 = vst [vmem:[%s14 + $0x8] sm:$0xff] %v1083
  %1754 = vst [vmem:[%s14 + $0x10] sm:$0xff] %v1084
  %1755 = vst [vmem:[%s14 + $0x18] sm:$0xff] %v1085
  %1756 = vst [vmem:[%s14 + $0x20] sm:$0xff] %v1086
  %1757 = vst [vmem:[%s14 + $0x28] sm:$0xff] %v1087
  %1758 = vst [vmem:[%s14 + $0x30] sm:$0xff] %v1088
  %1759 = vst [vmem:[%s14 + $0x38] sm:$0xff] %v1089
  %1760 = vst [vmem:[%s15] sm:$0xff] %v1750
  %1761 = vst [vmem:[%s15 + $0x8] sm:$0xff] %v1751
  // Predicated region
  $region58: #{graph_autoencoder.1} parent=0 // pred_check
    _
  $region59: #{graph_autoencoder.1} parent=0 // pred_check_branch
    %1763 = sbr.rel (0) target = $region61
  $region60: #{graph_autoencoder.1} parent=0 // pred_region
    _
  $region61: #{graph_autoencoder.1} parent=0 // pred_fallthru
    _
  // Predicated region
  $region62: #{graph_autoencoder.1} parent=0 // pred_check
    _
  $region63: #{graph_autoencoder.1} parent=0 // pred_check_branch
    %1765 = sbr.rel (0) target = $region65
  $region64: #{graph_autoencoder.1} parent=0 // pred_region
    _
  $region65: #{graph_autoencoder.1} parent=0 // pred_fallthru
    _
  // Predicated region
  $region66: #{graph_autoencoder.1} parent=0 // pred_check
    _
  $region67: #{graph_autoencoder.1} parent=0 // pred_check_branch
    %1767 = sbr.rel (0) target = $region69
  $region68: #{graph_autoencoder.1} parent=0 // pred_region
    _
  $region69: #{graph_autoencoder.1} parent=0 // pred_fallthru
    _
  // Predicated region
  $region70: #{graph_autoencoder.1} parent=0 // pred_check
    _
  $region71: #{graph_autoencoder.1} parent=0 // pred_check_branch
    %1769 = sbr.rel (0) target = $region73
  $region72: #{graph_autoencoder.1} parent=0 // pred_region
    _
  $region73: #{graph_autoencoder.1} parent=0 // pred_fallthru
    _

</llo_original>
